<compile_context>
chip_gen: v6e
topology: v6e:2x2x1
jax: 0.10.0
libtpu: 0.0.40
codegen_flags: <defaults>
</compile_context>

<pallas_src>
import math

import jax
import jax.numpy as jnp
from jax.experimental import pallas as pl
from jax.experimental.pallas import tpu as pltpu

_PAD = 4    # max one-sided padding over the 4 SMC branches (k=9 -> p=4)
_KMAX = 9   # all branch kernels packed / centered into 9 taps


def _erf_f32(x):
    # Abramowitz & Stegun 7.1.26: only mul/add/exp/abs/where -> lowers on Mosaic.
    ax = jnp.abs(x)
    t = 1.0 / (1.0 + 0.3275911 * ax)
    poly = t * (0.254829592 + t * (-0.284496736 + t * (1.421413741
             + t * (-1.453152027 + t * 1.061405429))))
    e = 1.0 - poly * jnp.exp(-ax * ax)
    return jnp.where(x >= 0, e, -e)


def _gelu_exact(x):
    return 0.5 * x * (1.0 + _erf_f32(x * (1.0 / math.sqrt(2.0))))


def lfe_block(x, params, tb=None):
    B, in_c, L = x.shape
    out_c = params["dconv_w"].shape[0]
    E = (L - 1) // 2 + 1                  # stride-2 output length == embed_dim
    H = params["ffn_w1"].shape[0]
    split_c = out_c // 4
    rep = out_c // in_c
    f32 = jnp.float32
    bf16 = jnp.bfloat16
    C = out_c

    # ---- batch-block size: target >=1024 packed lanes, but keep G >= 2 so the
    #      "parallel" batch axis can split across both TensorCores (v7x megacore) ----
    if tb is None:
        tb = max(1, -(-1024 // E))
        if B >= 2:
            tb = min(tb, B // 2)          # never let tb grow until G == 1
        tb = max(1, min(tb, B))
        q = 128 // math.gcd(E, 128)       # prefer TBE a multiple of 128 when possible
        if tb > q:
            tb = (tb // q) * q
    G = -(-B // tb)                       # grid steps (>= 2 whenever B >= 2)
    Bp = G * tb                           # batch padded up to a multiple of tb
    TBE = tb * E                          # packed (lane-dense) working width
    PHW = -(-(TBE + 4) // 128) * 128      # per-phase input slab width (128-aligned)

    xf = x.astype(f32)
    if Bp != B:
        xf = jnp.concatenate([xf, jnp.zeros((Bp - B, in_c, L), f32)], axis=0)

    # ---- dense batch->lane packing of the stride-2 even/odd phases (segment stride E,
    #      no per-segment pads); both phases concatenated along lanes -> one DMA/step ----
    def pack(v):                          # v: (Bp, in_c, len<=E)
        v = jnp.pad(v, ((0, 0), (0, 0), (0, E - v.shape[-1])))
        v = v.reshape(G, tb, in_c, E).transpose(0, 2, 1, 3).reshape(G, in_c, TBE)
        return jnp.pad(v, ((0, 0), (0, 0), (2, PHW - TBE - 2)))   # data at lanes [2, 2+TBE)

    x_eo = jnp.concatenate([pack(xf[:, :, 0::2]), pack(xf[:, :, 1::2])], axis=-1)

    # ---- grouped 1x1 conv -> (out_c, in_c) scale matrix (out channel j reads in channel j//rep) ----
    a_mat = jnp.zeros((out_c, in_c), f32).at[
        jnp.arange(out_c), jnp.arange(out_c) // rep].set(params["dconv_w"].astype(f32))

    # ---- pack the 4 depthwise branches (k=3,5,7,9 / p=1,2,3,4) into 9 centered taps ----
    wdw = jnp.zeros((out_c, _KMAX), f32)
    bdw = jnp.zeros((out_c,), f32)
    for i, (kk, pp) in enumerate(zip((3, 5, 7, 9), (1, 2, 3, 4))):
        off = _PAD - pp
        wdw = wdw.at[i * split_c:(i + 1) * split_c, off:off + kk].set(
            params[f"dw{i}_w"].astype(f32))
        bdw = bdw.at[i * split_c:(i + 1) * split_c].set(params[f"dw{i}_b"].astype(f32))

    # ---- BatchNorm1d (inference, initial running stats: mean=0, var=1) ----
    bn_scale = params["bn_g"].astype(f32) / jnp.sqrt(1.0 + 1e-5)
    bn_shift = params["bn_b"].astype(f32)

    # Per-tap edge validity (zero-padding of the depthwise conv input), shared by the
    # masked tap weights and by the folded dconv-bias term.
    n_idx = jnp.arange(E)[:, None]
    t_idx = jnp.arange(_KMAX)[None, :]
    src = 2 * n_idx + t_idx - _PAD
    valid = ((src >= 0) & (src <= L - 1)).astype(f32)                   # (E, 9)

    # Fold (dconv bias through the edge-truncated tap sums) + depthwise bias + BN shift into
    # one per-(channel, position) additive term; fold the BN scale into the taps.
    tap_sum = wdw @ valid.T                                             # (out_c, E)
    shift = (bdw[:, None] + params["dconv_b"].astype(f32)[:, None] * tap_sum) \
            * bn_scale[:, None] + bn_shift[:, None]                     # (out_c, E)
    shift_t = jnp.tile(shift, (1, tb))                                  # (out_c, TBE)
    wdw_s = wdw * bn_scale[:, None]                                     # BN-scaled taps

    # Masked tap-weight slabs: wmask[t, c, b*E+n] = wdw_s[c, t] * valid[n, t].
    # Cross-segment / out-of-range reads of the dense packing are zeroed exactly by
    # the mask, so no per-segment pads and no output compaction are needed.
    vt = jnp.tile(valid.T, (1, tb))                                     # (9, TBE)
    wmask = wdw_s.T[:, :, None] * vt[:, None, :]                        # (9, out_c, TBE)

    # ---- BSA weights: k & v stacked into one matmul; biases packed in one (C,3) array ----
    wkv = jnp.concatenate([params["bsa_k_w"].astype(f32),
                           params["bsa_v_w"].astype(f32)], axis=0)      # (2C, C)
    wc = params["bsa_c_w"].astype(f32)
    cvec = jnp.stack([params["bsa_k_b"], params["bsa_v_b"], params["bsa_c_b"]],
                     axis=1).astype(f32)                                # (C, 3)

    # ---- thin per-segment mean / broadcast matrices (replace the (TBE,TBE) kron) ----
    eye_tb = jnp.eye(tb, dtype=f32)
    seg_mean = jnp.kron(eye_tb, jnp.full((E, 1), 1.0 / E, f32))         # (TBE, tb)
    seg_bcast = jnp.kron(eye_tb, jnp.ones((1, E), f32))                 # (tb, TBE)

    # ---- FFN block-diagonal weights (bf16: halves VMEM, bf16 MXU path) ----
    w1_blk = jnp.kron(eye_tb, params["ffn_w1"].astype(f32).T).astype(bf16)   # (TBE, tb*H)
    w2_blk = jnp.kron(eye_tb, params["ffn_w2"].astype(f32).T).astype(bf16)   # (tb*H, TBE)
    b1_t = jnp.tile(params["ffn_b1"].astype(f32), tb).reshape(1, tb * H)

    # LayerNorm / FFN-bias vectors tiled over the batch block, packed into one array
    evec = jnp.stack([jnp.tile(params["ln1_g"].astype(f32), tb),
                      jnp.tile(params["ln1_b"].astype(f32), tb),
                      jnp.tile(params["ln2_g"].astype(f32), tb),
                      jnp.tile(params["ln2_b"].astype(f32), tb),
                      jnp.tile(params["ffn_b2"].astype(f32), tb)], axis=0)   # (5, TBE)

    weights = (a_mat, wmask, shift_t, cvec, wkv, wc,
               seg_mean, seg_bcast, w1_blk, b1_t, w2_blk, evec)

    # ------------------------------- kernel -------------------------------
    def kernel(xeo_ref, a_ref, wm_ref, shift_ref, cvec_ref, wkv_ref, wc_ref,
               s_ref, bc_ref, w1_ref, b1_ref, w2_ref, evec_ref,
               o_ref, yeo_ref):
        # ---- SMC: grouped 1x1 conv over both phases in one matmul; result kept in a
        #      VMEM scratch so the 9 tap FMAs stream slices (bounds vreg pressure) ----
        yeo_ref[...] = jnp.dot(a_ref[...], xeo_ref[...], preferred_element_type=f32)

        # ---- SMC: depthwise stride-2 conv as 9 masked-tap FMAs, directly lane-dense ----
        acc = yeo_ref[:, 0:TBE] * wm_ref[0]
        for t in range(1, _KMAX):
            off = (PHW if (t & 1) else 0) + (t >> 1)
            acc = acc + yeo_ref[:, off:off + TBE] * wm_ref[t]

        # biases + BatchNorm(eval) folded into shift_ref host-side; exact GELU
        z = _gelu_exact(acc + shift_ref[...])                           # (C, TBE)

        # ---- BSA (q / softmax branch of the reference is dead code: omitted) ----
        kv = jnp.dot(wkv_ref[...], z, preferred_element_type=f32)       # (2C, TBE)
        k_ = kv[0:C] + cvec_ref[:, 0:1]
        u = jnp.maximum(kv[C:2 * C] + cvec_ref[:, 1:2], 0.0)
        tkb = jnp.dot(u * (k_ + 1.0), s_ref[...], preferred_element_type=f32)  # (C, tb)
        tk = jnp.dot(tkb, bc_ref[...], preferred_element_type=f32)             # broadcast
        bsa = jnp.dot(wc_ref[...], tk * u, preferred_element_type=f32) + cvec_ref[:, 2:3]

        # ---- norm1(bsa) + smc residual (LayerNorm over embed_dim per batch segment;
        #      thin segment-sum + one stacked broadcast matmul) ----
        mu = jnp.dot(bsa, s_ref[...], preferred_element_type=f32)              # (C, tb)
        ex2 = jnp.dot(bsa * bsa, s_ref[...], preferred_element_type=f32)
        inv = jax.lax.rsqrt(jnp.maximum(ex2 - mu * mu, 0.0) + 1e-6)
        sb = jnp.dot(jnp.concatenate([inv, -mu * inv], axis=0), bc_ref[...],
                     preferred_element_type=f32)                               # (2C, TBE)
        n1 = (bsa * sb[0:C] + sb[C:2 * C]) * evec_ref[0:1, :] + evec_ref[1:2, :]
        h = n1 + z

        # ---- FFN over embed_dim (block-diagonal bf16 weights keep the packed layout) ----
        f1 = jnp.maximum(jnp.dot(h.astype(bf16), w1_ref[...],
                                 preferred_element_type=f32) + b1_ref[...], 0.0)
        f2 = jnp.dot(f1.astype(bf16), w2_ref[...],
                     preferred_element_type=f32) + evec_ref[4:5, :]

        # ---- norm2(ffn) + residual ----
        mu2 = jnp.dot(f2, s_ref[...], preferred_element_type=f32)
        ex22 = jnp.dot(f2 * f2, s_ref[...], preferred_element_type=f32)
        inv2 = jax.lax.rsqrt(jnp.maximum(ex22 - mu2 * mu2, 0.0) + 1e-6)
        sb2 = jnp.dot(jnp.concatenate([inv2, -mu2 * inv2], axis=0), bc_ref[...],
                      preferred_element_type=f32)
        n2 = (f2 * sb2[0:C] + sb2[C:2 * C]) * evec_ref[2:3, :] + evec_ref[3:4, :]

        o_ref[...] = (n2 + h).astype(o_ref.dtype)

    def wspec(arr):
        zeros = (0,) * arr.ndim
        return pl.BlockSpec(arr.shape, lambda i, z=zeros: z)

    out = pl.pallas_call(
        kernel,
        out_shape=jax.ShapeDtypeStruct((G, out_c, TBE), f32),
        grid_spec=pltpu.PrefetchScalarGridSpec(
            num_scalar_prefetch=0,
            grid=(G,),
            in_specs=[pl.BlockSpec((None, in_c, 2 * PHW), lambda i: (i, 0, 0))]
                     + [wspec(w) for w in weights],
            out_specs=pl.BlockSpec((None, out_c, TBE), lambda i: (i, 0, 0)),
            scratch_shapes=[pltpu.VMEM((out_c, 2 * PHW), f32)],
        ),
        compiler_params=pltpu.CompilerParams(
            dimension_semantics=("parallel",),
            vmem_limit_bytes=64 * 1024 * 1024,   # v5e scoped default is only 16 MiB
        ),
    )(x_eo, *weights)

    # (G, out_c, tb*E) -> (B, out_c, E)
    y = out.reshape(G, out_c, tb, E).transpose(0, 2, 1, 3).reshape(Bp, out_c, E)
    return y[:B]


if __name__ == "__main__":
    # Small shapes consistent with the module: x is (B, in_c, L); embed_dim = L // 2.
    B, in_c, out_c, L = 2, 4, 16, 16
    E = L // 2          # embed_dim = 8
    r = 4
    H = E // r          # FFN hidden = 2
    split_c = out_c // 4

    key = jax.random.PRNGKey(0)
    keys = iter(jax.random.split(key, 32))

    def rnd(shape, scale=0.1):
        return scale * jax.random.normal(next(keys), shape, jnp.float32)

    params = {
        "dconv_w": rnd((out_c,)),            # Conv1d(in_c,out_c,1,groups=in_c) weight squeezed
        "dconv_b": rnd((out_c,)),
        "bn_g": 1.0 + rnd((out_c,)),
        "bn_b": rnd((out_c,)),
        "bsa_k_w": rnd((out_c, out_c)), "bsa_k_b": rnd((out_c,)),
        "bsa_v_w": rnd((out_c, out_c)), "bsa_v_b": rnd((out_c,)),
        "bsa_c_w": rnd((out_c, out_c)), "bsa_c_b": rnd((out_c,)),
        "ln1_g": 1.0 + rnd((E,)), "ln1_b": rnd((E,)),
        "ffn_w1": rnd((H, E)), "ffn_b1": rnd((H,)),
        "ffn_w2": rnd((E, H)), "ffn_b2": rnd((E,)),
        "ln2_g": 1.0 + rnd((E,)), "ln2_b": rnd((E,)),
    }
    for i, kk in enumerate((3, 5, 7, 9)):
        params[f"dw{i}_w"] = rnd((split_c, kk))   # depthwise branch kernels
        params[f"dw{i}_b"] = rnd((split_c,))

    x = jax.random.normal(next(keys), (B, in_c, L), jnp.float32)

    y = lfe_block(x, params)
    jax.block_until_ready(y)
    assert y.shape == (B, out_c, E) and y.dtype == jnp.float32
    print("KERNEL_OK")
</pallas_src>

<mosaic_0001>
module attributes {stable_mosaic.version = 11 : i64} {
  func.func @kernel(%arg0: i32, %arg1: memref<1x4x256xf32, #tpu.memory_space<vmem>>, %arg2: memref<16x4xf32, #tpu.memory_space<vmem>>, %arg3: memref<9x16x8xf32, #tpu.memory_space<vmem>>, %arg4: memref<16x8xf32, #tpu.memory_space<vmem>>, %arg5: memref<16x3xf32, #tpu.memory_space<vmem>>, %arg6: memref<32x16xf32, #tpu.memory_space<vmem>>, %arg7: memref<16x16xf32, #tpu.memory_space<vmem>>, %arg8: memref<8x1xf32, #tpu.memory_space<vmem>>, %arg9: memref<1x8xf32, #tpu.memory_space<vmem>>, %arg10: memref<8x2xbf16, #tpu.memory_space<vmem>>, %arg11: memref<1x2xf32, #tpu.memory_space<vmem>>, %arg12: memref<2x8xbf16, #tpu.memory_space<vmem>>, %arg13: memref<5x8xf32, #tpu.memory_space<vmem>>, %arg14: memref<1x16x8xf32, #tpu.memory_space<vmem>>, %arg15: memref<16x256xf32, #tpu.memory_space<vmem>>) attributes {dimension_semantics = [#tpu.dimension_semantics<parallel>], iteration_bounds = array<i64: 2>, scalar_prefetch = 0 : i64, scratch_operands = 1 : i64, tpu.core_type = #tpu.core_type<tc>, window_params = [{transform_indices = @transform_0, window_bounds = array<i64: 1, 4, 256>}, {pipeline_mode = #tpu.pipeline_mode<synchronous>, transform_indices = @transform_1, window_bounds = array<i64: 16, 4>}, {pipeline_mode = #tpu.pipeline_mode<synchronous>, transform_indices = @transform_2, window_bounds = array<i64: 9, 16, 8>}, {pipeline_mode = #tpu.pipeline_mode<synchronous>, transform_indices = @transform_3, window_bounds = array<i64: 16, 8>}, {pipeline_mode = #tpu.pipeline_mode<synchronous>, transform_indices = @transform_4, window_bounds = array<i64: 16, 3>}, {pipeline_mode = #tpu.pipeline_mode<synchronous>, transform_indices = @transform_5, window_bounds = array<i64: 32, 16>}, {pipeline_mode = #tpu.pipeline_mode<synchronous>, transform_indices = @transform_6, window_bounds = array<i64: 16, 16>}, {pipeline_mode = #tpu.pipeline_mode<synchronous>, transform_indices = @transform_7, window_bounds = array<i64: 8, 1>}, {pipeline_mode = #tpu.pipeline_mode<synchronous>, transform_indices = @transform_8, window_bounds = array<i64: 1, 8>}, {pipeline_mode = #tpu.pipeline_mode<synchronous>, transform_indices = @transform_9, window_bounds = array<i64: 8, 2>}, {pipeline_mode = #tpu.pipeline_mode<synchronous>, transform_indices = @transform_10, window_bounds = array<i64: 1, 2>}, {pipeline_mode = #tpu.pipeline_mode<synchronous>, transform_indices = @transform_11, window_bounds = array<i64: 2, 8>}, {pipeline_mode = #tpu.pipeline_mode<synchronous>, transform_indices = @transform_12, window_bounds = array<i64: 5, 8>}, {transform_indices = @transform_13, window_bounds = array<i64: 1, 16, 8>}]} {
    %c0 = arith.constant 0 : index
    %c0_0 = arith.constant 0 : index
    %0 = vector.load %arg2[%c0, %c0_0] : memref<16x4xf32, #tpu.memory_space<vmem>>, vector<16x4xf32>
    %c0_1 = arith.constant 0 : index
    %c0_2 = arith.constant 0 : index
    %c0_3 = arith.constant 0 : index
    %1 = vector.load %arg1[%c0_1, %c0_2, %c0_3] : memref<1x4x256xf32, #tpu.memory_space<vmem>>, vector<1x4x256xf32>
    %2 = vector.shape_cast %1 : vector<1x4x256xf32> to vector<4x256xf32>
    %cst = arith.constant dense<0.000000e+00> : vector<16x256xf32>
    %3 = tpu.matmul %0, %2, %cst {dimension_numbers = #tpu.dot_dimension_numbers<[1], [0], [0], [1], [0, 0, 1, 1], [], []>} : vector<16x4xf32>, vector<4x256xf32>, vector<16x256xf32> -> vector<16x256xf32>
    %c0_4 = arith.constant 0 : index
    %c0_5 = arith.constant 0 : index
    %4 = vector.load %arg15[%c0_4, %c0_5] : memref<16x256xf32, #tpu.memory_space<vmem>>, vector<16x256xf32>
    tpu.vector_store %arg15[%c0_4, %c0_5], %3 {strides = array<i32>} : memref<16x256xf32, #tpu.memory_space<vmem>>, vector<16x256xf32>,
    %c0_6 = arith.constant 0 : index
    %c0_7 = arith.constant 0 : index
    %5 = vector.load %arg15[%c0_6, %c0_7] : memref<16x256xf32, #tpu.memory_space<vmem>>, vector<16x8xf32>
    %c0_8 = arith.constant 0 : index
    %c0_9 = arith.constant 0 : index
    %c0_10 = arith.constant 0 : index
    %6 = vector.load %arg3[%c0_8, %c0_9, %c0_10] : memref<9x16x8xf32, #tpu.memory_space<vmem>>, vector<1x16x8xf32>
    %7 = vector.shape_cast %6 : vector<1x16x8xf32> to vector<16x8xf32>
    %8 = arith.mulf %5, %7 : vector<16x8xf32>
    %c0_11 = arith.constant 0 : index
    %c128 = arith.constant 128 : index
    %9 = vector.load %arg15[%c0_11, %c128] : memref<16x256xf32, #tpu.memory_space<vmem>>, vector<16x8xf32>
    %c1 = arith.constant 1 : index
    %c0_12 = arith.constant 0 : index
    %c0_13 = arith.constant 0 : index
    %10 = vector.load %arg3[%c1, %c0_12, %c0_13] : memref<9x16x8xf32, #tpu.memory_space<vmem>>, vector<1x16x8xf32>
    %11 = vector.shape_cast %10 : vector<1x16x8xf32> to vector<16x8xf32>
    %12 = arith.mulf %9, %11 : vector<16x8xf32>
    %13 = arith.addf %8, %12 : vector<16x8xf32>
    %c0_14 = arith.constant 0 : index
    %c1_15 = arith.constant 1 : index
    %14 = vector.load %arg15[%c0_14, %c1_15] : memref<16x256xf32, #tpu.memory_space<vmem>>, vector<16x8xf32>
    %c2 = arith.constant 2 : index
    %c0_16 = arith.constant 0 : index
    %c0_17 = arith.constant 0 : index
    %15 = vector.load %arg3[%c2, %c0_16, %c0_17] : memref<9x16x8xf32, #tpu.memory_space<vmem>>, vector<1x16x8xf32>
    %16 = vector.shape_cast %15 : vector<1x16x8xf32> to vector<16x8xf32>
    %17 = arith.mulf %14, %16 : vector<16x8xf32>
    %18 = arith.addf %13, %17 : vector<16x8xf32>
    %c0_18 = arith.constant 0 : index
    %c129 = arith.constant 129 : index
    %19 = vector.load %arg15[%c0_18, %c129] : memref<16x256xf32, #tpu.memory_space<vmem>>, vector<16x8xf32>
    %c3 = arith.constant 3 : index
    %c0_19 = arith.constant 0 : index
    %c0_20 = arith.constant 0 : index
    %20 = vector.load %arg3[%c3, %c0_19, %c0_20] : memref<9x16x8xf32, #tpu.memory_space<vmem>>, vector<1x16x8xf32>
    %21 = vector.shape_cast %20 : vector<1x16x8xf32> to vector<16x8xf32>
    %22 = arith.mulf %19, %21 : vector<16x8xf32>
    %23 = arith.addf %18, %22 : vector<16x8xf32>
    %c0_21 = arith.constant 0 : index
    %c2_22 = arith.constant 2 : index
    %24 = vector.load %arg15[%c0_21, %c2_22] : memref<16x256xf32, #tpu.memory_space<vmem>>, vector<16x8xf32>
    %c4 = arith.constant 4 : index
    %c0_23 = arith.constant 0 : index
    %c0_24 = arith.constant 0 : index
    %25 = vector.load %arg3[%c4, %c0_23, %c0_24] : memref<9x16x8xf32, #tpu.memory_space<vmem>>, vector<1x16x8xf32>
    %26 = vector.shape_cast %25 : vector<1x16x8xf32> to vector<16x8xf32>
    %27 = arith.mulf %24, %26 : vector<16x8xf32>
    %28 = arith.addf %23, %27 : vector<16x8xf32>
    %c0_25 = arith.constant 0 : index
    %c130 = arith.constant 130 : index
    %29 = vector.load %arg15[%c0_25, %c130] : memref<16x256xf32, #tpu.memory_space<vmem>>, vector<16x8xf32>
    %c5 = arith.constant 5 : index
    %c0_26 = arith.constant 0 : index
    %c0_27 = arith.constant 0 : index
    %30 = vector.load %arg3[%c5, %c0_26, %c0_27] : memref<9x16x8xf32, #tpu.memory_space<vmem>>, vector<1x16x8xf32>
    %31 = vector.shape_cast %30 : vector<1x16x8xf32> to vector<16x8xf32>
    %32 = arith.mulf %29, %31 : vector<16x8xf32>
    %33 = arith.addf %28, %32 : vector<16x8xf32>
    %c0_28 = arith.constant 0 : index
    %c3_29 = arith.constant 3 : index
    %34 = vector.load %arg15[%c0_28, %c3_29] : memref<16x256xf32, #tpu.memory_space<vmem>>, vector<16x8xf32>
    %c6 = arith.constant 6 : index
    %c0_30 = arith.constant 0 : index
    %c0_31 = arith.constant 0 : index
    %35 = vector.load %arg3[%c6, %c0_30, %c0_31] : memref<9x16x8xf32, #tpu.memory_space<vmem>>, vector<1x16x8xf32>
    %36 = vector.shape_cast %35 : vector<1x16x8xf32> to vector<16x8xf32>
    %37 = arith.mulf %34, %36 : vector<16x8xf32>
    %38 = arith.addf %33, %37 : vector<16x8xf32>
    %c0_32 = arith.constant 0 : index
    %c131 = arith.constant 131 : index
    %39 = vector.load %arg15[%c0_32, %c131] : memref<16x256xf32, #tpu.memory_space<vmem>>, vector<16x8xf32>
    %c7 = arith.constant 7 : index
    %c0_33 = arith.constant 0 : index
    %c0_34 = arith.constant 0 : index
    %40 = vector.load %arg3[%c7, %c0_33, %c0_34] : memref<9x16x8xf32, #tpu.memory_space<vmem>>, vector<1x16x8xf32>
    %41 = vector.shape_cast %40 : vector<1x16x8xf32> to vector<16x8xf32>
    %42 = arith.mulf %39, %41 : vector<16x8xf32>
    %43 = arith.addf %38, %42 : vector<16x8xf32>
    %c0_35 = arith.constant 0 : index
    %c4_36 = arith.constant 4 : index
    %44 = vector.load %arg15[%c0_35, %c4_36] : memref<16x256xf32, #tpu.memory_space<vmem>>, vector<16x8xf32>
    %c8 = arith.constant 8 : index
    %c0_37 = arith.constant 0 : index
    %c0_38 = arith.constant 0 : index
    %45 = vector.load %arg3[%c8, %c0_37, %c0_38] : memref<9x16x8xf32, #tpu.memory_space<vmem>>, vector<1x16x8xf32>
    %46 = vector.shape_cast %45 : vector<1x16x8xf32> to vector<16x8xf32>
    %47 = arith.mulf %44, %46 : vector<16x8xf32>
    %48 = arith.addf %43, %47 : vector<16x8xf32>
    %c0_39 = arith.constant 0 : index
    %c0_40 = arith.constant 0 : index
    %49 = vector.load %arg4[%c0_39, %c0_40] : memref<16x8xf32, #tpu.memory_space<vmem>>, vector<16x8xf32>
    %50 = arith.addf %48, %49 : vector<16x8xf32>
    %cst_41 = arith.constant 5.000000e-01 : f32
    %51 = vector.broadcast %cst_41 : f32 to vector<16x8xf32>
    %52 = arith.mulf %51, %50 : vector<16x8xf32>
    %cst_42 = arith.constant 0.707106769 : f32
    %53 = vector.broadcast %cst_42 : f32 to vector<16x8xf32>
    %54 = arith.mulf %50, %53 : vector<16x8xf32>
    %55 = math.absf %54 : vector<16x8xf32>
    %cst_43 = arith.constant 0.327591091 : f32
    %56 = vector.broadcast %cst_43 : f32 to vector<16x8xf32>
    %57 = arith.mulf %56, %55 : vector<16x8xf32>
    %cst_44 = arith.constant 1.000000e+00 : f32
    %58 = vector.broadcast %cst_44 : f32 to vector<16x8xf32>
    %59 = arith.addf %58, %57 : vector<16x8xf32>
    %cst_45 = arith.constant 1.000000e+00 : f32
    %60 = vector.broadcast %cst_45 : f32 to vector<16x8xf32>
    %61 = arith.divf %60, %59 : vector<16x8xf32>
    %cst_46 = arith.constant 1.06140542 : f32
    %62 = vector.broadcast %cst_46 : f32 to vector<16x8xf32>
    %63 = arith.mulf %61, %62 : vector<16x8xf32>
    %cst_47 = arith.constant -1.45315206 : f32
    %64 = vector.broadcast %cst_47 : f32 to vector<16x8xf32>
    %65 = arith.addf %64, %63 : vector<16x8xf32>
    %66 = arith.mulf %61, %65 : vector<16x8xf32>
    %cst_48 = arith.constant 1.42141378 : f32
    %67 = vector.broadcast %cst_48 : f32 to vector<16x8xf32>
    %68 = arith.addf %67, %66 : vector<16x8xf32>
    %69 = arith.mulf %61, %68 : vector<16x8xf32>
    %cst_49 = arith.constant -0.284496725 : f32
    %70 = vector.broadcast %cst_49 : f32 to vector<16x8xf32>
    %71 = arith.addf %70, %69 : vector<16x8xf32>
    %72 = arith.mulf %61, %71 : vector<16x8xf32>
    %cst_50 = arith.constant 0.254829586 : f32
    %73 = vector.broadcast %cst_50 : f32 to vector<16x8xf32>
    %74 = arith.addf %73, %72 : vector<16x8xf32>
    %75 = arith.mulf %61, %74 : vector<16x8xf32>
    %cst_51 = arith.constant 0.000000e+00 : f32
    %76 = vector.broadcast %cst_51 : f32 to vector<16x8xf32>
    %77 = arith.subf %76, %55 : vector<16x8xf32>
    %78 = arith.mulf %77, %55 : vector<16x8xf32>
    %79 = math.exp %78 : vector<16x8xf32>
    %80 = arith.mulf %75, %79 : vector<16x8xf32>
    %cst_52 = arith.constant 1.000000e+00 : f32
    %81 = vector.broadcast %cst_52 : f32 to vector<16x8xf32>
    %82 = arith.subf %81, %80 : vector<16x8xf32>
    %cst_53 = arith.constant 0.000000e+00 : f32
    %83 = vector.broadcast %cst_53 : f32 to vector<16x8xf32>
    %84 = arith.cmpf oge, %54, %83 : vector<16x8xf32>
    %cst_54 = arith.constant 0.000000e+00 : f32
    %85 = vector.broadcast %cst_54 : f32 to vector<16x8xf32>
    %86 = arith.subf %85, %82 : vector<16x8xf32>
    %87 = arith.select %84, %82, %86 : vector<16x8xi1>, vector<16x8xf32>
    %cst_55 = arith.constant 1.000000e+00 : f32
    %88 = vector.broadcast %cst_55 : f32 to vector<16x8xf32>
    %89 = arith.addf %88, %87 : vector<16x8xf32>
    %90 = arith.mulf %52, %89 : vector<16x8xf32>
    %c0_56 = arith.constant 0 : index
    %c0_57 = arith.constant 0 : index
    %91 = vector.load %arg6[%c0_56, %c0_57] : memref<32x16xf32, #tpu.memory_space<vmem>>, vector<32x16xf32>
    %cst_58 = arith.constant dense<0.000000e+00> : vector<32x8xf32>
    %92 = tpu.matmul %91, %90, %cst_58 {dimension_numbers = #tpu.dot_dimension_numbers<[1], [0], [0], [1], [0, 0, 1, 1], [], []>} : vector<32x16xf32>, vector<16x8xf32>, vector<32x8xf32> -> vector<32x8xf32>
    %93 = vector.extract_strided_slice %92 {offsets = [0, 0], sizes = [16, 8], strides = [1, 1]} : vector<32x8xf32> to vector<16x8xf32>
    %c0_59 = arith.constant 0 : index
    %c0_60 = arith.constant 0 : index
    %94 = vector.load %arg5[%c0_59, %c0_60] : memref<16x3xf32, #tpu.memory_space<vmem>>, vector<16x1xf32>
    %95 = vector.broadcast %94 : vector<16x1xf32> to vector<16x8xf32>
    %96 = arith.addf %93, %95 : vector<16x8xf32>
    %97 = vector.extract_strided_slice %92 {offsets = [16, 0], sizes = [16, 8], strides = [1, 1]} : vector<32x8xf32> to vector<16x8xf32>
    %c0_61 = arith.constant 0 : index
    %c1_62 = arith.constant 1 : index
    %98 = vector.load %arg5[%c0_61, %c1_62] : memref<16x3xf32, #tpu.memory_space<vmem>>, vector<16x1xf32>
    %99 = vector.broadcast %98 : vector<16x1xf32> to vector<16x8xf32>
    %100 = arith.addf %97, %99 : vector<16x8xf32>
    %cst_63 = arith.constant 0.000000e+00 : f32
    %101 = vector.broadcast %cst_63 : f32 to vector<16x8xf32>
    %102 = arith.maximumf %100, %101 : vector<16x8xf32>
    %cst_64 = arith.constant 1.000000e+00 : f32
    %103 = vector.broadcast %cst_64 : f32 to vector<16x8xf32>
    %104 = arith.addf %96, %103 : vector<16x8xf32>
    %105 = arith.mulf %102, %104 : vector<16x8xf32>
    %c0_65 = arith.constant 0 : index
    %c0_66 = arith.constant 0 : index
    %106 = vector.load %arg8[%c0_65, %c0_66] : memref<8x1xf32, #tpu.memory_space<vmem>>, vector<8x1xf32>
    %cst_67 = arith.constant dense<0.000000e+00> : vector<16x1xf32>
    %107 = tpu.matmul %105, %106, %cst_67 {dimension_numbers = #tpu.dot_dimension_numbers<[1], [0], [0], [1], [0, 0, 1, 1], [], []>} : vector<16x8xf32>, vector<8x1xf32>, vector<16x1xf32> -> vector<16x1xf32>
    %c0_68 = arith.constant 0 : index
    %c0_69 = arith.constant 0 : index
    %108 = vector.load %arg9[%c0_68, %c0_69] : memref<1x8xf32, #tpu.memory_space<vmem>>, vector<1x8xf32>
    %cst_70 = arith.constant dense<0.000000e+00> : vector<16x8xf32>
    %109 = tpu.matmul %107, %108, %cst_70 {dimension_numbers = #tpu.dot_dimension_numbers<[1], [0], [0], [1], [0, 0, 1, 1], [], []>} : vector<16x1xf32>, vector<1x8xf32>, vector<16x8xf32> -> vector<16x8xf32>
    %c0_71 = arith.constant 0 : index
    %c0_72 = arith.constant 0 : index
    %110 = vector.load %arg7[%c0_71, %c0_72] : memref<16x16xf32, #tpu.memory_space<vmem>>, vector<16x16xf32>
    %111 = arith.mulf %109, %102 : vector<16x8xf32>
    %cst_73 = arith.constant dense<0.000000e+00> : vector<16x8xf32>
    %112 = tpu.matmul %110, %111, %cst_73 {dimension_numbers = #tpu.dot_dimension_numbers<[1], [0], [0], [1], [0, 0, 1, 1], [], []>} : vector<16x16xf32>, vector<16x8xf32>, vector<16x8xf32> -> vector<16x8xf32>
    %c0_74 = arith.constant 0 : index
    %c2_75 = arith.constant 2 : index
    %113 = vector.load %arg5[%c0_74, %c2_75] : memref<16x3xf32, #tpu.memory_space<vmem>>, vector<16x1xf32>
    %114 = vector.broadcast %113 : vector<16x1xf32> to vector<16x8xf32>
    %115 = arith.addf %112, %114 : vector<16x8xf32>
    %c0_76 = arith.constant 0 : index
    %c0_77 = arith.constant 0 : index
    %116 = vector.load %arg8[%c0_76, %c0_77] : memref<8x1xf32, #tpu.memory_space<vmem>>, vector<8x1xf32>
    %cst_78 = arith.constant dense<0.000000e+00> : vector<16x1xf32>
    %117 = tpu.matmul %115, %116, %cst_78 {dimension_numbers = #tpu.dot_dimension_numbers<[1], [0], [0], [1], [0, 0, 1, 1], [], []>} : vector<16x8xf32>, vector<8x1xf32>, vector<16x1xf32> -> vector<16x1xf32>
    %118 = arith.mulf %115, %115 : vector<16x8xf32>
    %c0_79 = arith.constant 0 : index
    %c0_80 = arith.constant 0 : index
    %119 = vector.load %arg8[%c0_79, %c0_80] : memref<8x1xf32, #tpu.memory_space<vmem>>, vector<8x1xf32>
    %cst_81 = arith.constant dense<0.000000e+00> : vector<16x1xf32>
    %120 = tpu.matmul %118, %119, %cst_81 {dimension_numbers = #tpu.dot_dimension_numbers<[1], [0], [0], [1], [0, 0, 1, 1], [], []>} : vector<16x8xf32>, vector<8x1xf32>, vector<16x1xf32> -> vector<16x1xf32>
    %121 = arith.mulf %117, %117 : vector<16x1xf32>
    %122 = arith.subf %120, %121 : vector<16x1xf32>
    %cst_82 = arith.constant 0.000000e+00 : f32
    %123 = vector.broadcast %cst_82 : f32 to vector<16x1xf32>
    %124 = arith.maximumf %122, %123 : vector<16x1xf32>
    %cst_83 = arith.constant 9.99999997E-7 : f32
    %125 = vector.broadcast %cst_83 : f32 to vector<16x1xf32>
    %126 = arith.addf %124, %125 : vector<16x1xf32>
    %127 = math.rsqrt %126 : vector<16x1xf32>
    %cst_84 = arith.constant 0.000000e+00 : f32
    %128 = vector.broadcast %cst_84 : f32 to vector<16x1xf32>
    %129 = arith.subf %128, %117 : vector<16x1xf32>
    %130 = arith.mulf %129, %127 : vector<16x1xf32>
    %131 = tpu.concatenate %127, %130 in 0 : vector<16x1xf32>, vector<16x1xf32> -> vector<32x1xf32>
    %c0_85 = arith.constant 0 : index
    %c0_86 = arith.constant 0 : index
    %132 = vector.load %arg9[%c0_85, %c0_86] : memref<1x8xf32, #tpu.memory_space<vmem>>, vector<1x8xf32>
    %cst_87 = arith.constant dense<0.000000e+00> : vector<32x8xf32>
    %133 = tpu.matmul %131, %132, %cst_87 {dimension_numbers = #tpu.dot_dimension_numbers<[1], [0], [0], [1], [0, 0, 1, 1], [], []>} : vector<32x1xf32>, vector<1x8xf32>, vector<32x8xf32> -> vector<32x8xf32>
    %134 = vector.extract_strided_slice %133 {offsets = [0, 0], sizes = [16, 8], strides = [1, 1]} : vector<32x8xf32> to vector<16x8xf32>
    %135 = arith.mulf %115, %134 : vector<16x8xf32>
    %136 = vector.extract_strided_slice %133 {offsets = [16, 0], sizes = [16, 8], strides = [1, 1]} : vector<32x8xf32> to vector<16x8xf32>
    %137 = arith.addf %135, %136 : vector<16x8xf32>
    %c0_88 = arith.constant 0 : index
    %c0_89 = arith.constant 0 : index
    %138 = vector.load %arg13[%c0_88, %c0_89] : memref<5x8xf32, #tpu.memory_space<vmem>>, vector<1x8xf32>
    %139 = vector.broadcast %138 : vector<1x8xf32> to vector<16x8xf32>
    %140 = arith.mulf %137, %139 : vector<16x8xf32>
    %c1_90 = arith.constant 1 : index
    %c0_91 = arith.constant 0 : index
    %141 = vector.load %arg13[%c1_90, %c0_91] : memref<5x8xf32, #tpu.memory_space<vmem>>, vector<1x8xf32>
    %142 = vector.broadcast %141 : vector<1x8xf32> to vector<16x8xf32>
    %143 = arith.addf %140, %142 : vector<16x8xf32>
    %144 = arith.addf %143, %90 : vector<16x8xf32>
    %145 = arith.truncf %144 : vector<16x8xf32> to vector<16x8xbf16>
    %c0_92 = arith.constant 0 : index
    %c0_93 = arith.constant 0 : index
    %146 = vector.load %arg10[%c0_92, %c0_93] : memref<8x2xbf16, #tpu.memory_space<vmem>>, vector<8x2xbf16>
    %cst_94 = arith.constant dense<0.000000e+00> : vector<16x2xf32>
    %147 = tpu.matmul %145, %146, %cst_94 {dimension_numbers = #tpu.dot_dimension_numbers<[1], [0], [0], [1], [0, 0, 1, 1], [], []>} : vector<16x8xbf16>, vector<8x2xbf16>, vector<16x2xf32> -> vector<16x2xf32>
    %c0_95 = arith.constant 0 : index
    %c0_96 = arith.constant 0 : index
    %148 = vector.load %arg11[%c0_95, %c0_96] : memref<1x2xf32, #tpu.memory_space<vmem>>, vector<1x2xf32>
    %149 = vector.broadcast %148 : vector<1x2xf32> to vector<16x2xf32>
    %150 = arith.addf %147, %149 : vector<16x2xf32>
    %cst_97 = arith.constant 0.000000e+00 : f32
    %151 = vector.broadcast %cst_97 : f32 to vector<16x2xf32>
    %152 = arith.maximumf %150, %151 : vector<16x2xf32>
    %153 = arith.truncf %152 : vector<16x2xf32> to vector<16x2xbf16>
    %c0_98 = arith.constant 0 : index
    %c0_99 = arith.constant 0 : index
    %154 = vector.load %arg12[%c0_98, %c0_99] : memref<2x8xbf16, #tpu.memory_space<vmem>>, vector<2x8xbf16>
    %cst_100 = arith.constant dense<0.000000e+00> : vector<16x8xf32>
    %155 = tpu.matmul %153, %154, %cst_100 {dimension_numbers = #tpu.dot_dimension_numbers<[1], [0], [0], [1], [0, 0, 1, 1], [], []>} : vector<16x2xbf16>, vector<2x8xbf16>, vector<16x8xf32> -> vector<16x8xf32>
    %c4_101 = arith.constant 4 : index
    %c0_102 = arith.constant 0 : index
    %156 = vector.load %arg13[%c4_101, %c0_102] : memref<5x8xf32, #tpu.memory_space<vmem>>, vector<1x8xf32>
    %157 = vector.broadcast %156 : vector<1x8xf32> to vector<16x8xf32>
    %158 = arith.addf %155, %157 : vector<16x8xf32>
    %c0_103 = arith.constant 0 : index
    %c0_104 = arith.constant 0 : index
    %159 = vector.load %arg8[%c0_103, %c0_104] : memref<8x1xf32, #tpu.memory_space<vmem>>, vector<8x1xf32>
    %cst_105 = arith.constant dense<0.000000e+00> : vector<16x1xf32>
    %160 = tpu.matmul %158, %159, %cst_105 {dimension_numbers = #tpu.dot_dimension_numbers<[1], [0], [0], [1], [0, 0, 1, 1], [], []>} : vector<16x8xf32>, vector<8x1xf32>, vector<16x1xf32> -> vector<16x1xf32>
    %161 = arith.mulf %158, %158 : vector<16x8xf32>
    %c0_106 = arith.constant 0 : index
    %c0_107 = arith.constant 0 : index
    %162 = vector.load %arg8[%c0_106, %c0_107] : memref<8x1xf32, #tpu.memory_space<vmem>>, vector<8x1xf32>
    %cst_108 = arith.constant dense<0.000000e+00> : vector<16x1xf32>
    %163 = tpu.matmul %161, %162, %cst_108 {dimension_numbers = #tpu.dot_dimension_numbers<[1], [0], [0], [1], [0, 0, 1, 1], [], []>} : vector<16x8xf32>, vector<8x1xf32>, vector<16x1xf32> -> vector<16x1xf32>
    %164 = arith.mulf %160, %160 : vector<16x1xf32>
    %165 = arith.subf %163, %164 : vector<16x1xf32>
    %cst_109 = arith.constant 0.000000e+00 : f32
    %166 = vector.broadcast %cst_109 : f32 to vector<16x1xf32>
    %167 = arith.maximumf %165, %166 : vector<16x1xf32>
    %cst_110 = arith.constant 9.99999997E-7 : f32
    %168 = vector.broadcast %cst_110 : f32 to vector<16x1xf32>
    %169 = arith.addf %167, %168 : vector<16x1xf32>
    %170 = math.rsqrt %169 : vector<16x1xf32>
    %cst_111 = arith.constant 0.000000e+00 : f32
    %171 = vector.broadcast %cst_111 : f32 to vector<16x1xf32>
    %172 = arith.subf %171, %160 : vector<16x1xf32>
    %173 = arith.mulf %172, %170 : vector<16x1xf32>
    %174 = tpu.concatenate %170, %173 in 0 : vector<16x1xf32>, vector<16x1xf32> -> vector<32x1xf32>
    %c0_112 = arith.constant 0 : index
    %c0_113 = arith.constant 0 : index
    %175 = vector.load %arg9[%c0_112, %c0_113] : memref<1x8xf32, #tpu.memory_space<vmem>>, vector<1x8xf32>
    %cst_114 = arith.constant dense<0.000000e+00> : vector<32x8xf32>
    %176 = tpu.matmul %174, %175, %cst_114 {dimension_numbers = #tpu.dot_dimension_numbers<[1], [0], [0], [1], [0, 0, 1, 1], [], []>} : vector<32x1xf32>, vector<1x8xf32>, vector<32x8xf32> -> vector<32x8xf32>
    %177 = vector.extract_strided_slice %176 {offsets = [0, 0], sizes = [16, 8], strides = [1, 1]} : vector<32x8xf32> to vector<16x8xf32>
    %178 = arith.mulf %158, %177 : vector<16x8xf32>
    %179 = vector.extract_strided_slice %176 {offsets = [16, 0], sizes = [16, 8], strides = [1, 1]} : vector<32x8xf32> to vector<16x8xf32>
    %180 = arith.addf %178, %179 : vector<16x8xf32>
    %c2_115 = arith.constant 2 : index
    %c0_116 = arith.constant 0 : index
    %181 = vector.load %arg13[%c2_115, %c0_116] : memref<5x8xf32, #tpu.memory_space<vmem>>, vector<1x8xf32>
    %182 = vector.broadcast %181 : vector<1x8xf32> to vector<16x8xf32>
    %183 = arith.mulf %180, %182 : vector<16x8xf32>
    %c3_117 = arith.constant 3 : index
    %c0_118 = arith.constant 0 : index
    %184 = vector.load %arg13[%c3_117, %c0_118] : memref<5x8xf32, #tpu.memory_space<vmem>>, vector<1x8xf32>
    %185 = vector.broadcast %184 : vector<1x8xf32> to vector<16x8xf32>
    %186 = arith.addf %183, %185 : vector<16x8xf32>
    %187 = arith.addf %186, %144 : vector<16x8xf32>
    %c0_119 = arith.constant 0 : index
    %c0_120 = arith.constant 0 : index
    %c0_121 = arith.constant 0 : index
    %188 = vector.load %arg14[%c0_119, %c0_120, %c0_121] : memref<1x16x8xf32, #tpu.memory_space<vmem>>, vector<1x16x8xf32>
    %189 = vector.shape_cast %188 : vector<1x16x8xf32> to vector<16x8xf32>
    %190 = vector.shape_cast %187 : vector<16x8xf32> to vector<1x16x8xf32>
    tpu.vector_store %arg14[%c0_119, %c0_120, %c0_121], %190 {strides = array<i32>} : memref<1x16x8xf32, #tpu.memory_space<vmem>>, vector<1x16x8xf32>,
    return
  }
  func.func @transform_0(%arg0: i32) -> (i32, i32, i32) {
    %c0_i32 = arith.constant 0 : i32
    %c0_i32_0 = arith.constant 0 : i32
    %c0_i32_1 = arith.constant 0 : i32
    return %arg0, %c0_i32, %c0_i32_0 : i32, i32, i32
  }
  func.func @transform_1(%arg0: i32) -> (i32, i32) {
    %c0_i32 = arith.constant 0 : i32
    %c0_i32_0 = arith.constant 0 : i32
    %c0_i32_1 = arith.constant 0 : i32
    return %c0_i32, %c0_i32_0 : i32, i32
  }
  func.func @transform_2(%arg0: i32) -> (i32, i32, i32) {
    %c0_i32 = arith.constant 0 : i32
    %c0_i32_0 = arith.constant 0 : i32
    %c0_i32_1 = arith.constant 0 : i32
    %c0_i32_2 = arith.constant 0 : i32
    return %c0_i32, %c0_i32_0, %c0_i32_1 : i32, i32, i32
  }
  func.func @transform_3(%arg0: i32) -> (i32, i32) {
    %c0_i32 = arith.constant 0 : i32
    %c0_i32_0 = arith.constant 0 : i32
    %c0_i32_1 = arith.constant 0 : i32
    return %c0_i32, %c0_i32_0 : i32, i32
  }
  func.func @transform_4(%arg0: i32) -> (i32, i32) {
    %c0_i32 = arith.constant 0 : i32
    %c0_i32_0 = arith.constant 0 : i32
    %c0_i32_1 = arith.constant 0 : i32
    return %c0_i32, %c0_i32_0 : i32, i32
  }
  func.func @transform_5(%arg0: i32) -> (i32, i32) {
    %c0_i32 = arith.constant 0 : i32
    %c0_i32_0 = arith.constant 0 : i32
    %c0_i32_1 = arith.constant 0 : i32
    return %c0_i32, %c0_i32_0 : i32, i32
  }
  func.func @transform_6(%arg0: i32) -> (i32, i32) {
    %c0_i32 = arith.constant 0 : i32
    %c0_i32_0 = arith.constant 0 : i32
    %c0_i32_1 = arith.constant 0 : i32
    return %c0_i32, %c0_i32_0 : i32, i32
  }
  func.func @transform_7(%arg0: i32) -> (i32, i32) {
    %c0_i32 = arith.constant 0 : i32
    %c0_i32_0 = arith.constant 0 : i32
    %c0_i32_1 = arith.constant 0 : i32
    return %c0_i32, %c0_i32_0 : i32, i32
  }
  func.func @transform_8(%arg0: i32) -> (i32, i32) {
    %c0_i32 = arith.constant 0 : i32
    %c0_i32_0 = arith.constant 0 : i32
    %c0_i32_1 = arith.constant 0 : i32
    return %c0_i32, %c0_i32_0 : i32, i32
  }
  func.func @transform_9(%arg0: i32) -> (i32, i32) {
    %c0_i32 = arith.constant 0 : i32
    %c0_i32_0 = arith.constant 0 : i32
    %c0_i32_1 = arith.constant 0 : i32
    return %c0_i32, %c0_i32_0 : i32, i32
  }
  func.func @transform_10(%arg0: i32) -> (i32, i32) {
    %c0_i32 = arith.constant 0 : i32
    %c0_i32_0 = arith.constant 0 : i32
    %c0_i32_1 = arith.constant 0 : i32
    return %c0_i32, %c0_i32_0 : i32, i32
  }
  func.func @transform_11(%arg0: i32) -> (i32, i32) {
    %c0_i32 = arith.constant 0 : i32
    %c0_i32_0 = arith.constant 0 : i32
    %c0_i32_1 = arith.constant 0 : i32
    return %c0_i32, %c0_i32_0 : i32, i32
  }
  func.func @transform_12(%arg0: i32) -> (i32, i32) {
    %c0_i32 = arith.constant 0 : i32
    %c0_i32_0 = arith.constant 0 : i32
    %c0_i32_1 = arith.constant 0 : i32
    return %c0_i32, %c0_i32_0 : i32, i32
  }
  func.func @transform_13(%arg0: i32) -> (i32, i32, i32) {
    %c0_i32 = arith.constant 0 : i32
    %c0_i32_0 = arith.constant 0 : i32
    %c0_i32_1 = arith.constant 0 : i32
    return %arg0, %c0_i32, %c0_i32_0 : i32, i32, i32
  }
}

</mosaic_0001>

<llo_original>
// kernel: tpu_custom_call.1
$region0: #{tpu_custom_call.1}
  #allocation0 [shape = 'u32[]', space=smem, size = 0x4, offset = 0x4, fixed_abs, tag = 'smem constant byte address 0x4 - core index']
  #allocation1 [shape = 'u32[144,128]{1,0:T(1,128)}', space=vmem, size = 0x12000, scoped, tag = 'internal scratch']
  #allocation2 [shape = 'f32[16,256]{1,0:T(8,128)}', space=vmem, size = 0x4000, scoped, tag = 'scratch operand']
  %s0 = inlined_call_operand.vmem [shape: f32[2,4,256], index: 0, kind: input, shape index: {}]
  %s1 = inlined_call_operand.vmem [shape: f32[16,4], index: 1, kind: input, shape index: {}]
  %s2 = inlined_call_operand.vmem [shape: f32[9,16,8], index: 2, kind: input, shape index: {}]
  %s3 = inlined_call_operand.vmem [shape: f32[16,8], index: 3, kind: input, shape index: {}]
  %s4 = inlined_call_operand.vmem [shape: f32[16,3], index: 4, kind: input, shape index: {}]
  %s5 = inlined_call_operand.vmem [shape: f32[32,16], index: 5, kind: input, shape index: {}]
  %s6 = inlined_call_operand.vmem [shape: f32[16,16], index: 6, kind: input, shape index: {}]
  %s7 = inlined_call_operand.vmem [shape: f32[8,1], index: 7, kind: input, shape index: {}]
  %s8 = inlined_call_operand.vmem [shape: f32[1,8], index: 8, kind: input, shape index: {}]
  %s9 = inlined_call_operand.vmem [shape: bf16[8,2], index: 9, kind: input, shape index: {}]
  %s10 = inlined_call_operand.vmem [shape: f32[1,2], index: 10, kind: input, shape index: {}]
  %s11 = inlined_call_operand.vmem [shape: bf16[2,8], index: 11, kind: input, shape index: {}]
  %s12 = inlined_call_operand.vmem [shape: f32[5,8], index: 12, kind: input, shape index: {}]
  %s13 = inlined_call_operand.vmem [shape: f32[2,16,8], index: 13, kind: output, shape index: {}]
  %s14 = sld [smem:[#allocation0]]
  $region85: #{tpu_custom_call.1} parent=0
    _
  %s16 = ssub.s32 1, %s14
  %s17 = scalar_select 0, %s16, %s14
  loop: start=0, step=1, limit=4
  $region2: #{tpu_custom_call.1} parent=0 // loop_pre_header
    _
  $region3: #{tpu_custom_call.1} parent=0 // loop_header
    %s19 = sphi 0, %s23
    %p20 = scmp.ge.s32.totalorder %s19, 4
    %s29 = sphi 0, %s31
    %s32 = sphi 0, %s29
    %s33 = sphi 0, %s32
    %s49 = sphi 0, %s33
    %s53 = sphi 0, %s53
    %s55 = sphi 0, %s53
    %s56 = sphi 0, %s55
    %s70 = sphi 0, %s56
    %s74 = sphi 0, %s74
    %s76 = sphi 0, %s74
    %s77 = sphi 0, %s76
    %s91 = sphi 0, %s77
    %s95 = sphi 0, %s95
    %s97 = sphi 0, %s95
    %s98 = sphi 0, %s97
    %s112 = sphi 0, %s98
    %s116 = sphi 0, %s116
    %s118 = sphi 0, %s116
    %s119 = sphi 0, %s118
    %s133 = sphi 0, %s119
    %s137 = sphi 0, %s137
    %s139 = sphi 0, %s137
    %s140 = sphi 0, %s139
    %s154 = sphi 0, %s140
    %s158 = sphi 0, %s158
    %s160 = sphi 0, %s158
    %s161 = sphi 0, %s160
    %s175 = sphi 0, %s161
    %s179 = sphi 0, %s179
    %s181 = sphi 0, %s179
    %s182 = sphi 0, %s181
    %s196 = sphi 0, %s182
    %s200 = sphi 0, %s200
    %s202 = sphi 0, %s200
    %s203 = sphi 0, %s202
    %s217 = sphi 0, %s203
    %s221 = sphi 0, %s221
    %s223 = sphi 0, %s221
    %s224 = sphi 0, %s223
    %s238 = sphi 0, %s224
    %s242 = sphi 0, %s242
    %s244 = sphi 0, %s242
    %s245 = sphi 0, %s244
    %s259 = sphi 0, %s245
    %s263 = sphi 0, %s263
    %s265 = sphi 0, %s263
    %s266 = sphi 0, %s265
    %s280 = sphi 0, %s266
    %s284 = sphi 0, %s284
    %s286 = sphi 0, %s284
    %s287 = sphi 0, %s286
    %s301 = sphi 0, %s287
    %s307 = sphi 0, %s309
    %s310 = sphi 0, %s307
    %s311 = sphi 0, %s310
    %s327 = sphi 0, %s311
  $region4: #{tpu_custom_call.1} parent=0 // loop_header_branch
    %22 = sbr.rel (%p20) target = $region8
  $region5: #{tpu_custom_call.1} parent=0 // loop_body
    %s24 = ssub.s32 %s19, 1
    %s25 = ssub.s32 %s19, 2
    %s26 = sadd.s32 %s19, 1
    %s27 = ssub.s32 %s19, %s26
    %p28 = scmp.eq.s32.totalorder %s27, 0
    %s30 = sadd.s32 %s29, 1
    %s31 = scalar_select %p28, %s29, %s30
    %p34 = pneg %p28
    %p35 = scmp.eq.s32.totalorder %s19, 1
    %p36 = por %p34, %p35
    %p37 = scmp.ne.s32.totalorder %s29, %s32
    %p38 = scmp.eq.s32.totalorder %s19, 0
    %p39 = por %p37, %p38
    %p40 = scmp.ne.s32.totalorder %s29, %s32
    %p41 = scmp.eq.s32.totalorder %s24, 1
    %p42 = por %p40, %p41
    %p43 = scmp.ne.s32.totalorder %s32, %s33
    %p44 = scmp.eq.s32.totalorder %s24, 0
    %p45 = por %p43, %p44
    %p46 = scmp.ne.s32.totalorder %s32, %s33
    %p47 = scmp.eq.s32.totalorder %s25, 1
    %p48 = por %p46, %p47
    %p50 = scmp.ne.s32.totalorder %s33, %s49
    %p51 = scmp.eq.s32.totalorder %s25, 0
    %p52 = por %p50, %p51
    %s54 = sadd.s32 %s53, 1
    %p57 = scmp.eq.s32.totalorder %s19, 1
    %p58 = scmp.ne.s32.totalorder %s53, %s55
    %p59 = scmp.eq.s32.totalorder %s19, 0
    %p60 = por %p58, %p59
    %p61 = scmp.ne.s32.totalorder %s53, %s55
    %p62 = scmp.eq.s32.totalorder %s24, 1
    %p63 = por %p61, %p62
    %p64 = scmp.ne.s32.totalorder %s55, %s56
    %p65 = scmp.eq.s32.totalorder %s24, 0
    %p66 = por %p64, %p65
    %p67 = scmp.ne.s32.totalorder %s55, %s56
    %p68 = scmp.eq.s32.totalorder %s25, 1
    %p69 = por %p67, %p68
    %p71 = scmp.ne.s32.totalorder %s56, %s70
    %p72 = scmp.eq.s32.totalorder %s25, 0
    %p73 = por %p71, %p72
    %s75 = sadd.s32 %s74, 1
    %p78 = scmp.eq.s32.totalorder %s19, 1
    %p79 = scmp.ne.s32.totalorder %s74, %s76
    %p80 = scmp.eq.s32.totalorder %s19, 0
    %p81 = por %p79, %p80
    %p82 = scmp.ne.s32.totalorder %s74, %s76
    %p83 = scmp.eq.s32.totalorder %s24, 1
    %p84 = por %p82, %p83
    %p85 = scmp.ne.s32.totalorder %s76, %s77
    %p86 = scmp.eq.s32.totalorder %s24, 0
    %p87 = por %p85, %p86
    %p88 = scmp.ne.s32.totalorder %s76, %s77
    %p89 = scmp.eq.s32.totalorder %s25, 1
    %p90 = por %p88, %p89
    %p92 = scmp.ne.s32.totalorder %s77, %s91
    %p93 = scmp.eq.s32.totalorder %s25, 0
    %p94 = por %p92, %p93
    %s96 = sadd.s32 %s95, 1
    %p99 = scmp.eq.s32.totalorder %s19, 1
    %p100 = scmp.ne.s32.totalorder %s95, %s97
    %p101 = scmp.eq.s32.totalorder %s19, 0
    %p102 = por %p100, %p101
    %p103 = scmp.ne.s32.totalorder %s95, %s97
    %p104 = scmp.eq.s32.totalorder %s24, 1
    %p105 = por %p103, %p104
    %p106 = scmp.ne.s32.totalorder %s97, %s98
    %p107 = scmp.eq.s32.totalorder %s24, 0
    %p108 = por %p106, %p107
    %p109 = scmp.ne.s32.totalorder %s97, %s98
    %p110 = scmp.eq.s32.totalorder %s25, 1
    %p111 = por %p109, %p110
    %p113 = scmp.ne.s32.totalorder %s98, %s112
    %p114 = scmp.eq.s32.totalorder %s25, 0
    %p115 = por %p113, %p114
    %s117 = sadd.s32 %s116, 1
    %p120 = scmp.eq.s32.totalorder %s19, 1
    %p121 = scmp.ne.s32.totalorder %s116, %s118
    %p122 = scmp.eq.s32.totalorder %s19, 0
    %p123 = por %p121, %p122
    %p124 = scmp.ne.s32.totalorder %s116, %s118
    %p125 = scmp.eq.s32.totalorder %s24, 1
    %p126 = por %p124, %p125
    %p127 = scmp.ne.s32.totalorder %s118, %s119
    %p128 = scmp.eq.s32.totalorder %s24, 0
    %p129 = por %p127, %p128
    %p130 = scmp.ne.s32.totalorder %s118, %s119
    %p131 = scmp.eq.s32.totalorder %s25, 1
    %p132 = por %p130, %p131
    %p134 = scmp.ne.s32.totalorder %s119, %s133
    %p135 = scmp.eq.s32.totalorder %s25, 0
    %p136 = por %p134, %p135
    %s138 = sadd.s32 %s137, 1
    %p141 = scmp.eq.s32.totalorder %s19, 1
    %p142 = scmp.ne.s32.totalorder %s137, %s139
    %p143 = scmp.eq.s32.totalorder %s19, 0
    %p144 = por %p142, %p143
    %p145 = scmp.ne.s32.totalorder %s137, %s139
    %p146 = scmp.eq.s32.totalorder %s24, 1
    %p147 = por %p145, %p146
    %p148 = scmp.ne.s32.totalorder %s139, %s140
    %p149 = scmp.eq.s32.totalorder %s24, 0
    %p150 = por %p148, %p149
    %p151 = scmp.ne.s32.totalorder %s139, %s140
    %p152 = scmp.eq.s32.totalorder %s25, 1
    %p153 = por %p151, %p152
    %p155 = scmp.ne.s32.totalorder %s140, %s154
    %p156 = scmp.eq.s32.totalorder %s25, 0
    %p157 = por %p155, %p156
    %s159 = sadd.s32 %s158, 1
    %p162 = scmp.eq.s32.totalorder %s19, 1
    %p163 = scmp.ne.s32.totalorder %s158, %s160
    %p164 = scmp.eq.s32.totalorder %s19, 0
    %p165 = por %p163, %p164
    %p166 = scmp.ne.s32.totalorder %s158, %s160
    %p167 = scmp.eq.s32.totalorder %s24, 1
    %p168 = por %p166, %p167
    %p169 = scmp.ne.s32.totalorder %s160, %s161
    %p170 = scmp.eq.s32.totalorder %s24, 0
    %p171 = por %p169, %p170
    %p172 = scmp.ne.s32.totalorder %s160, %s161
    %p173 = scmp.eq.s32.totalorder %s25, 1
    %p174 = por %p172, %p173
    %p176 = scmp.ne.s32.totalorder %s161, %s175
    %p177 = scmp.eq.s32.totalorder %s25, 0
    %p178 = por %p176, %p177
    %s180 = sadd.s32 %s179, 1
    %p183 = scmp.eq.s32.totalorder %s19, 1
    %p184 = scmp.ne.s32.totalorder %s179, %s181
    %p185 = scmp.eq.s32.totalorder %s19, 0
    %p186 = por %p184, %p185
    %p187 = scmp.ne.s32.totalorder %s179, %s181
    %p188 = scmp.eq.s32.totalorder %s24, 1
    %p189 = por %p187, %p188
    %p190 = scmp.ne.s32.totalorder %s181, %s182
    %p191 = scmp.eq.s32.totalorder %s24, 0
    %p192 = por %p190, %p191
    %p193 = scmp.ne.s32.totalorder %s181, %s182
    %p194 = scmp.eq.s32.totalorder %s25, 1
    %p195 = por %p193, %p194
    %p197 = scmp.ne.s32.totalorder %s182, %s196
    %p198 = scmp.eq.s32.totalorder %s25, 0
    %p199 = por %p197, %p198
    %s201 = sadd.s32 %s200, 1
    %p204 = scmp.eq.s32.totalorder %s19, 1
    %p205 = scmp.ne.s32.totalorder %s200, %s202
    %p206 = scmp.eq.s32.totalorder %s19, 0
    %p207 = por %p205, %p206
    %p208 = scmp.ne.s32.totalorder %s200, %s202
    %p209 = scmp.eq.s32.totalorder %s24, 1
    %p210 = por %p208, %p209
    %p211 = scmp.ne.s32.totalorder %s202, %s203
    %p212 = scmp.eq.s32.totalorder %s24, 0
    %p213 = por %p211, %p212
    %p214 = scmp.ne.s32.totalorder %s202, %s203
    %p215 = scmp.eq.s32.totalorder %s25, 1
    %p216 = por %p214, %p215
    %p218 = scmp.ne.s32.totalorder %s203, %s217
    %p219 = scmp.eq.s32.totalorder %s25, 0
    %p220 = por %p218, %p219
    %s222 = sadd.s32 %s221, 1
    %p225 = scmp.eq.s32.totalorder %s19, 1
    %p226 = scmp.ne.s32.totalorder %s221, %s223
    %p227 = scmp.eq.s32.totalorder %s19, 0
    %p228 = por %p226, %p227
    %p229 = scmp.ne.s32.totalorder %s221, %s223
    %p230 = scmp.eq.s32.totalorder %s24, 1
    %p231 = por %p229, %p230
    %p232 = scmp.ne.s32.totalorder %s223, %s224
    %p233 = scmp.eq.s32.totalorder %s24, 0
    %p234 = por %p232, %p233
    %p235 = scmp.ne.s32.totalorder %s223, %s224
    %p236 = scmp.eq.s32.totalorder %s25, 1
    %p237 = por %p235, %p236
    %p239 = scmp.ne.s32.totalorder %s224, %s238
    %p240 = scmp.eq.s32.totalorder %s25, 0
    %p241 = por %p239, %p240
    %s243 = sadd.s32 %s242, 1
    %p246 = scmp.eq.s32.totalorder %s19, 1
    %p247 = scmp.ne.s32.totalorder %s242, %s244
    %p248 = scmp.eq.s32.totalorder %s19, 0
    %p249 = por %p247, %p248
    %p250 = scmp.ne.s32.totalorder %s242, %s244
    %p251 = scmp.eq.s32.totalorder %s24, 1
    %p252 = por %p250, %p251
    %p253 = scmp.ne.s32.totalorder %s244, %s245
    %p254 = scmp.eq.s32.totalorder %s24, 0
    %p255 = por %p253, %p254
    %p256 = scmp.ne.s32.totalorder %s244, %s245
    %p257 = scmp.eq.s32.totalorder %s25, 1
    %p258 = por %p256, %p257
    %p260 = scmp.ne.s32.totalorder %s245, %s259
    %p261 = scmp.eq.s32.totalorder %s25, 0
    %p262 = por %p260, %p261
    %s264 = sadd.s32 %s263, 1
    %p267 = scmp.eq.s32.totalorder %s19, 1
    %p268 = scmp.ne.s32.totalorder %s263, %s265
    %p269 = scmp.eq.s32.totalorder %s19, 0
    %p270 = por %p268, %p269
    %p271 = scmp.ne.s32.totalorder %s263, %s265
    %p272 = scmp.eq.s32.totalorder %s24, 1
    %p273 = por %p271, %p272
    %p274 = scmp.ne.s32.totalorder %s265, %s266
    %p275 = scmp.eq.s32.totalorder %s24, 0
    %p276 = por %p274, %p275
    %p277 = scmp.ne.s32.totalorder %s265, %s266
    %p278 = scmp.eq.s32.totalorder %s25, 1
    %p279 = por %p277, %p278
    %p281 = scmp.ne.s32.totalorder %s266, %s280
    %p282 = scmp.eq.s32.totalorder %s25, 0
    %p283 = por %p281, %p282
    %s285 = sadd.s32 %s284, 1
    %p288 = scmp.eq.s32.totalorder %s19, 1
    %p289 = scmp.ne.s32.totalorder %s284, %s286
    %p290 = scmp.eq.s32.totalorder %s19, 0
    %p291 = por %p289, %p290
    %p292 = scmp.ne.s32.totalorder %s284, %s286
    %p293 = scmp.eq.s32.totalorder %s24, 1
    %p294 = por %p292, %p293
    %p295 = scmp.ne.s32.totalorder %s286, %s287
    %p296 = scmp.eq.s32.totalorder %s24, 0
    %p297 = por %p295, %p296
    %p298 = scmp.ne.s32.totalorder %s286, %s287
    %p299 = scmp.eq.s32.totalorder %s25, 1
    %p300 = por %p298, %p299
    %p302 = scmp.ne.s32.totalorder %s287, %s301
    %p303 = scmp.eq.s32.totalorder %s25, 0
    %p304 = por %p302, %p303
    %s305 = ssub.s32 %s19, %s26
    %p306 = scmp.eq.s32.totalorder %s305, 0
    %s308 = sadd.s32 %s307, 1
    %s309 = scalar_select %p306, %s307, %s308
    %p312 = pneg %p306
    %p313 = scmp.eq.s32.totalorder %s19, 1
    %p314 = por %p312, %p313
    %p315 = scmp.ne.s32.totalorder %s307, %s310
    %p316 = scmp.eq.s32.totalorder %s19, 0
    %p317 = por %p315, %p316
    %p318 = scmp.ne.s32.totalorder %s307, %s310
    %p319 = scmp.eq.s32.totalorder %s24, 1
    %p320 = por %p318, %p319
    %p321 = scmp.ne.s32.totalorder %s310, %s311
    %p322 = scmp.eq.s32.totalorder %s24, 0
    %p323 = por %p321, %p322
    %p324 = scmp.ne.s32.totalorder %s310, %s311
    %p325 = scmp.eq.s32.totalorder %s25, 1
    %p326 = por %p324, %p325
    %p328 = scmp.ne.s32.totalorder %s311, %s327
    %p329 = scmp.eq.s32.totalorder %s25, 0
    %p330 = por %p328, %p329
    %p331 = scmp.le.s32.totalorder 1, %s19
    %p332 = scmp.lt.s32.totalorder %s19, 3
    %p333 = pnand %p331, %p332
    %p334 = pneg %p333
    // Predicated region
    $region9: #{tpu_custom_call.1} parent=5 // pred_check
      _
    $region10: #{tpu_custom_call.1} parent=5 // pred_check_branch
      %336 = sbr.rel (%p333) target = $region12
    $region11: #{tpu_custom_call.1} parent=5 // pred_region
      %s337 = ssub.s32 %s19, 1
      // Predicated region
      $region13: #{tpu_custom_call.1} parent=11 // pred_check
        %p338 = pneg %p66
      $region14: #{tpu_custom_call.1} parent=11 // pred_check_branch
        %340 = sbr.rel (%p338) target = $region16
      $region15: #{tpu_custom_call.1} parent=11 // pred_region
        _
      $region16: #{tpu_custom_call.1} parent=11 // pred_fallthru
        _
      // Predicated region
      $region17: #{tpu_custom_call.1} parent=11 // pred_check
        %p341 = pneg %p87
      $region18: #{tpu_custom_call.1} parent=11 // pred_check_branch
        %343 = sbr.rel (%p341) target = $region20
      $region19: #{tpu_custom_call.1} parent=11 // pred_region
        _
      $region20: #{tpu_custom_call.1} parent=11 // pred_fallthru
        _
      // Predicated region
      $region21: #{tpu_custom_call.1} parent=11 // pred_check
        %p344 = pneg %p108
      $region22: #{tpu_custom_call.1} parent=11 // pred_check_branch
        %346 = sbr.rel (%p344) target = $region24
      $region23: #{tpu_custom_call.1} parent=11 // pred_region
        _
      $region24: #{tpu_custom_call.1} parent=11 // pred_fallthru
        _
      // Predicated region
      $region25: #{tpu_custom_call.1} parent=11 // pred_check
        %p347 = pneg %p129
      $region26: #{tpu_custom_call.1} parent=11 // pred_check_branch
        %349 = sbr.rel (%p347) target = $region28
      $region27: #{tpu_custom_call.1} parent=11 // pred_region
        _
      $region28: #{tpu_custom_call.1} parent=11 // pred_fallthru
        _
      // Predicated region
      $region29: #{tpu_custom_call.1} parent=11 // pred_check
        %p350 = pneg %p150
      $region30: #{tpu_custom_call.1} parent=11 // pred_check_branch
        %352 = sbr.rel (%p350) target = $region32
      $region31: #{tpu_custom_call.1} parent=11 // pred_region
        _
      $region32: #{tpu_custom_call.1} parent=11 // pred_fallthru
        _
      // Predicated region
      $region33: #{tpu_custom_call.1} parent=11 // pred_check
        %p353 = pneg %p171
      $region34: #{tpu_custom_call.1} parent=11 // pred_check_branch
        %355 = sbr.rel (%p353) target = $region36
      $region35: #{tpu_custom_call.1} parent=11 // pred_region
        _
      $region36: #{tpu_custom_call.1} parent=11 // pred_fallthru
        _
      // Predicated region
      $region37: #{tpu_custom_call.1} parent=11 // pred_check
        %p356 = pneg %p192
      $region38: #{tpu_custom_call.1} parent=11 // pred_check_branch
        %358 = sbr.rel (%p356) target = $region40
      $region39: #{tpu_custom_call.1} parent=11 // pred_region
        _
      $region40: #{tpu_custom_call.1} parent=11 // pred_fallthru
        _
      // Predicated region
      $region41: #{tpu_custom_call.1} parent=11 // pred_check
        %p359 = pneg %p213
      $region42: #{tpu_custom_call.1} parent=11 // pred_check_branch
        %361 = sbr.rel (%p359) target = $region44
      $region43: #{tpu_custom_call.1} parent=11 // pred_region
        _
      $region44: #{tpu_custom_call.1} parent=11 // pred_fallthru
        _
      // Predicated region
      $region45: #{tpu_custom_call.1} parent=11 // pred_check
        %p362 = pneg %p234
      $region46: #{tpu_custom_call.1} parent=11 // pred_check_branch
        %364 = sbr.rel (%p362) target = $region48
      $region47: #{tpu_custom_call.1} parent=11 // pred_region
        _
      $region48: #{tpu_custom_call.1} parent=11 // pred_fallthru
        _
      // Predicated region
      $region49: #{tpu_custom_call.1} parent=11 // pred_check
        %p365 = pneg %p255
      $region50: #{tpu_custom_call.1} parent=11 // pred_check_branch
        %367 = sbr.rel (%p365) target = $region52
      $region51: #{tpu_custom_call.1} parent=11 // pred_region
        _
      $region52: #{tpu_custom_call.1} parent=11 // pred_fallthru
        _
      // Predicated region
      $region53: #{tpu_custom_call.1} parent=11 // pred_check
        %p368 = pneg %p276
      $region54: #{tpu_custom_call.1} parent=11 // pred_check_branch
        %370 = sbr.rel (%p368) target = $region56
      $region55: #{tpu_custom_call.1} parent=11 // pred_region
        _
      $region56: #{tpu_custom_call.1} parent=11 // pred_fallthru
        _
      // Predicated region
      $region57: #{tpu_custom_call.1} parent=11 // pred_check
        %p371 = pneg %p297
      $region58: #{tpu_custom_call.1} parent=11 // pred_check_branch
        %373 = sbr.rel (%p371) target = $region60
      $region59: #{tpu_custom_call.1} parent=11 // pred_region
        _
      $region60: #{tpu_custom_call.1} parent=11 // pred_fallthru
        _
    $region12: #{tpu_custom_call.1} parent=5 // pred_fallthru
      _
    %p374 = scmp.lt.s32.totalorder %s19, 2
    // Predicated region
    $region61: #{tpu_custom_call.1} parent=5 // pred_check
      %p375 = pneg %p374
    $region62: #{tpu_custom_call.1} parent=5 // pred_check_branch
      %377 = sbr.rel (%p375) target = $region64
    $region63: #{tpu_custom_call.1} parent=5 // pred_region
      // Predicated region
      $region65: #{tpu_custom_call.1} parent=63 // pred_check
        %p378 = pneg %p39
      $region66: #{tpu_custom_call.1} parent=63 // pred_check_branch
        %380 = sbr.rel (%p378) target = $region68
      $region67: #{tpu_custom_call.1} parent=63 // pred_region
        %p381 = scmp.lt.s32.totalorder %s19, 1
        %s382 = scalar_select %p381, %s19, 1
        %s383 = smul.addr %s382, 2
        %s384 = smul.addr %s383, 4
        %s385 = scalar_lea.vmem %s0, %s384
      $region68: #{tpu_custom_call.1} parent=63 // pred_fallthru
        _
    $region64: #{tpu_custom_call.1} parent=5 // pred_fallthru
      _
    %p386 = scmp.le.s32.totalorder 1, %s19
    %p387 = scmp.lt.s32.totalorder %s19, 3
    %p388 = pnand %p386, %p387
    %p389 = pneg %p388
    // Predicated region
    $region69: #{tpu_custom_call.1} parent=5 // pred_check
      _
    $region70: #{tpu_custom_call.1} parent=5 // pred_check_branch
      %391 = sbr.rel (%p388) target = $region72
    $region71: #{tpu_custom_call.1} parent=5 // pred_region
      %s392 = ssub.s32 %s19, 1
      %p393 = scmp.lt.s32.totalorder %s24, 1
      %s394 = scalar_select %p393, %s24, 1
      %s395 = smul.addr %s394, 2
      %s396 = smul.addr %s395, 4
      %s397 = scalar_lea.vmem %s0, %s396
      %p398 = pneg %p45
      %p399 = pneg %p42
      %p400 = pneg %p66
      %p401 = pneg %p63
      %p402 = pneg %p87
      %p403 = pneg %p84
      %p404 = pneg %p108
      %p405 = pneg %p105
      %p406 = pneg %p129
      %p407 = pneg %p126
      %p408 = pneg %p150
      %p409 = pneg %p147
      %p410 = pneg %p171
      %p411 = pneg %p168
      %p412 = pneg %p192
      %p413 = pneg %p189
      %p414 = pneg %p213
      %p415 = pneg %p210
      %p416 = pneg %p234
      %p417 = pneg %p231
      %p418 = pneg %p255
      %p419 = pneg %p252
      %p420 = pneg %p276
      %p421 = pneg %p273
      %p422 = pneg %p297
      %p423 = pneg %p294
      %p424 = pneg %p323
      %p425 = pneg %p320
      %p426 = scmp.lt.s32.totalorder %s24, 1
      %s427 = scalar_select %p426, %s24, 1
      %s428 = smul.addr %s427, 2
      %s429 = smul.addr %s428, 8
      %s430 = scalar_lea.vmem %s13, %s429
      %p431 = scmp.lt.s32.totalorder %s24, 1
      %s432 = scalar_select %p431, %s24, 1
      %s433 = smul.addr %s432, 2
      %s434 = smul.addr %s433, 4
      %s435 = scalar_lea.vmem %s0, %s434
      %p436 = scmp.lt.s32.totalorder %s24, 1
      %s437 = scalar_select %p436, %s24, 1
      %s438 = smul.addr %s437, 2
      %s439 = smul.addr %s438, 8
      %s440 = scalar_lea.vmem %s13, %s439
      %v442 = vld [vmem:[%s1] sm:$0xff]
      %v443 = vld [vmem:[%s1 + $0x8] sm:$0xff]
      %v444 = vld [vmem:[%s435] sm:$0xff]
      %v446 = vcombine.high %v444, %v444
      %vm447 = vcmask 31744
      %v449 = vsel %vm447, %v442, 0
      %v452 = vsel %vm447, %v443, 0
      %vm454 = vcmask 1043456
      %v455 = vsel %vm454, %v444, 0
      %v457 = vsel %vm454, %v446, 0
      %459 = vmatprep.subr.mxu0 0.0
      %460 = vmatpush1.msra.mxu0 0.0
      %461 = vmatprep.subr.mxu0 0.0
      %462 = vmatpush1.msra.mxu0 0.0
      %463 = vmatprep.subr.mxu0 0.0
      %464 = vmatpush1.msra.mxu0 0.0
      %465 = vmatprep.subr.mxu0 0.0
      %466 = vmatpush1.msra.mxu0 0.0
      %467 = vmatprep.subr.mxu0 0.0
      %468 = vmatpush1.msra.mxu0 0.0
      %469 = vmatprep.subr.mxu0 0.0
      %470 = vmatpush1.msra.mxu0 0.0
      %471 = vmatprep.subr.mxu0 0.0
      %472 = vmatpush1.msra.mxu0 0.0
      %473 = vmatprep.subr.mxu0 0.0
      %474 = vmatpush1.msra.mxu0 0.0
      %475 = vmatprep.subr.mxu0 0.0
      %476 = vmatpush1.msra.mxu0 0.0
      %477 = vmatprep.subr.mxu0 0.0
      %478 = vmatpush1.msra.mxu0 0.0
      %479 = vmatprep.subr.mxu0 0.0
      %480 = vmatpush1.msra.mxu0 0.0
      %481 = vmatprep.subr.mxu0 0.0
      %482 = vmatpush1.msra.mxu0 0.0
      %483 = vmatprep.subr.mxu0 0.0
      %484 = vmatpush1.msra.mxu0 0.0
      %485 = vmatprep.subr.mxu0 0.0
      %486 = vmatpush1.msra.mxu0 0.0
      %487 = vmatprep.subr.mxu0 0.0
      %488 = vmatpush1.msra.mxu0 0.0
      %489 = vmatprep.subr.mxu0 %v457
      %490 = vmatpush1.msra.mxu0 %v455
      %491 = vmatprep.subr.mxu0 0.0
      %492 = vmatpush2.msra.mxu0 0.0
      %493 = vmatprep.subr.mxu0 0.0
      %494 = vmatpush2.msra.mxu0 0.0
      %495 = vmatprep.subr.mxu0 0.0
      %496 = vmatpush2.msra.mxu0 0.0
      %497 = vmatprep.subr.mxu0 0.0
      %498 = vmatpush2.msra.mxu0 0.0
      %499 = vmatprep.subr.mxu0 0.0
      %500 = vmatpush2.msra.mxu0 0.0
      %501 = vmatprep.subr.mxu0 0.0
      %502 = vmatpush2.msra.mxu0 0.0
      %503 = vmatprep.subr.mxu0 0.0
      %504 = vmatpush2.msra.mxu0 0.0
      %505 = vmatprep.subr.mxu0 0.0
      %506 = vmatpush2.msra.mxu0 0.0
      %507 = vmatprep.subr.mxu0 0.0
      %508 = vmatpush2.msra.mxu0 0.0
      %509 = vmatprep.subr.mxu0 0.0
      %510 = vmatpush2.msra.mxu0 0.0
      %511 = vmatprep.subr.mxu0 0.0
      %512 = vmatpush2.msra.mxu0 0.0
      %513 = vmatprep.subr.mxu0 0.0
      %514 = vmatpush2.msra.mxu0 0.0
      %515 = vmatprep.subr.mxu0 0.0
      %516 = vmatpush2.msra.mxu0 0.0
      %517 = vmatprep.subr.mxu0 0.0
      %518 = vmatpush2.msra.mxu0 0.0
      %519 = vmatprep.subr.mxu0 0.0
      %520 = vmatpush2.msra.mxu0 0.0
      %521 = vmatprep.subr.mxu0 0.0
      %522 = vmatpush2.msra.mxu0 0.0
      %523 = vmatprep.mubr.f32.mxu0 0.0
      %524 = vmatmul.mubr.f32.gmra.mxu0 %v449
      %v525 = vpop.f32.mrf.mxu0
      %v526 = vadd.f32 0.0, %v525
      %v527 = vpop.f32.mrf.mxu0
      %v528 = vadd.f32 0.0, %v527
      %529 = vmatprep.mubr.f32.mxu0 0.0
      %530 = vmatmul.mubr.f32.gmra.mxu0 %v452
      %v531 = vpop.f32.mrf.mxu0
      %v532 = vadd.f32 0.0, %v531
      %v533 = vpop.f32.mrf.mxu0
      %v534 = vadd.f32 0.0, %v533
      %535 = vdwg.mxu0
      %536 = vst [vmem:[#allocation2] sm:$0xff] %v526
      %537 = vst [vmem:[#allocation2 + $0x8] sm:$0xff] %v528
      %538 = vst [vmem:[#allocation2 + $0x10] sm:$0xff] %v532
      %539 = vst [vmem:[#allocation2 + $0x18] sm:$0xff] %v534
      %v540 = vld [vmem:[#allocation2] sm:$0xff]
      %v541 = vld [vmem:[#allocation2 + $0x10] sm:$0xff]
      %v542 = vld [vmem:[%s2] sm:$0xff]
      %v543 = vld [vmem:[%s2 + $0x8] sm:$0xff]
      %v544 = vmul.f32 %v540, %v542
      %v545 = vmul.f32 %v541, %v543
      %v546 = vld [vmem:[#allocation2 + $0x8] sm:$0xff]
      %v547 = vld [vmem:[#allocation2 + $0x18] sm:$0xff]
      %s548 = scalar_lea.vmem %s2, 16
      %v549 = vld [vmem:[%s548] sm:$0xff]
      %v550 = vld [vmem:[%s548 + $0x8] sm:$0xff]
      %v551 = vmul.f32 %v546, %v549
      %v552 = vmul.f32 %v547, %v550
      %v553 = vadd.f32 %v544, %v551
      %v554 = vadd.f32 %v545, %v552
      %s555 = scalar_lea.vmem %s2, 32
      %v556 = vld [vmem:[%s555] sm:$0xff]
      %v557 = vld [vmem:[%s555 + $0x8] sm:$0xff]
      %560 = vrot.lane.b32.xlu0 %v556, 1
      %v561 = vpop.permute.xlu0 %560
      %562 = vrot.lane.b32.xlu0 %v557, 1
      %v563 = vpop.permute.xlu0 %562
      %v566 = vmul.f32 %v540, %v561
      %v567 = vmul.f32 %v541, %v563
      %570 = vrot.lane.b32.xlu0 %v566, 127
      %v571 = vpop.permute.xlu0 %570
      %572 = vrot.lane.b32.xlu0 %v567, 127
      %v573 = vpop.permute.xlu0 %572
      %v576 = vadd.f32 %v553, %v571
      %v577 = vadd.f32 %v554, %v573
      %s578 = scalar_lea.vmem %s2, 48
      %v579 = vld [vmem:[%s578] sm:$0xff]
      %v580 = vld [vmem:[%s578 + $0x8] sm:$0xff]
      %583 = vrot.lane.b32.xlu0 %v579, 1
      %v584 = vpop.permute.xlu0 %583
      %585 = vrot.lane.b32.xlu0 %v580, 1
      %v586 = vpop.permute.xlu0 %585
      %v589 = vmul.f32 %v546, %v584
      %v590 = vmul.f32 %v547, %v586
      %593 = vrot.lane.b32.xlu0 %v589, 127
      %v594 = vpop.permute.xlu0 %593
      %595 = vrot.lane.b32.xlu0 %v590, 127
      %v596 = vpop.permute.xlu0 %595
      %v599 = vadd.f32 %v576, %v594
      %v600 = vadd.f32 %v577, %v596
      %s601 = scalar_lea.vmem %s2, 64
      %v602 = vld [vmem:[%s601] sm:$0xff]
      %v603 = vld [vmem:[%s601 + $0x8] sm:$0xff]
      %606 = vrot.lane.b32.xlu0 %v602, 2
      %v607 = vpop.permute.xlu0 %606
      %608 = vrot.lane.b32.xlu0 %v603, 2
      %v609 = vpop.permute.xlu0 %608
      %v612 = vmul.f32 %v540, %v607
      %v613 = vmul.f32 %v541, %v609
      %616 = vrot.lane.b32.xlu0 %v612, 126
      %v617 = vpop.permute.xlu0 %616
      %618 = vrot.lane.b32.xlu0 %v613, 126
      %v619 = vpop.permute.xlu0 %618
      %v622 = vadd.f32 %v599, %v617
      %v623 = vadd.f32 %v600, %v619
      %s624 = scalar_lea.vmem %s2, 80
      %v625 = vld [vmem:[%s624] sm:$0xff]
      %v626 = vld [vmem:[%s624 + $0x8] sm:$0xff]
      %629 = vrot.lane.b32.xlu0 %v625, 2
      %v630 = vpop.permute.xlu0 %629
      %631 = vrot.lane.b32.xlu0 %v626, 2
      %v632 = vpop.permute.xlu0 %631
      %v635 = vmul.f32 %v546, %v630
      %v636 = vmul.f32 %v547, %v632
      %639 = vrot.lane.b32.xlu0 %v635, 126
      %v640 = vpop.permute.xlu0 %639
      %641 = vrot.lane.b32.xlu0 %v636, 126
      %v642 = vpop.permute.xlu0 %641
      %v645 = vadd.f32 %v622, %v640
      %v646 = vadd.f32 %v623, %v642
      %s647 = scalar_lea.vmem %s2, 96
      %v648 = vld [vmem:[%s647] sm:$0xff]
      %v649 = vld [vmem:[%s647 + $0x8] sm:$0xff]
      %652 = vrot.lane.b32.xlu0 %v648, 3
      %v653 = vpop.permute.xlu0 %652
      %654 = vrot.lane.b32.xlu0 %v649, 3
      %v655 = vpop.permute.xlu0 %654
      %v658 = vmul.f32 %v540, %v653
      %v659 = vmul.f32 %v541, %v655
      %662 = vrot.lane.b32.xlu0 %v658, 125
      %v663 = vpop.permute.xlu0 %662
      %664 = vrot.lane.b32.xlu0 %v659, 125
      %v665 = vpop.permute.xlu0 %664
      %v668 = vadd.f32 %v645, %v663
      %v669 = vadd.f32 %v646, %v665
      %s670 = scalar_lea.vmem %s2, 112
      %v671 = vld [vmem:[%s670] sm:$0xff]
      %v672 = vld [vmem:[%s670 + $0x8] sm:$0xff]
      %675 = vrot.lane.b32.xlu0 %v671, 3
      %v676 = vpop.permute.xlu0 %675
      %677 = vrot.lane.b32.xlu0 %v672, 3
      %v678 = vpop.permute.xlu0 %677
      %v681 = vmul.f32 %v546, %v676
      %v682 = vmul.f32 %v547, %v678
      %685 = vrot.lane.b32.xlu0 %v681, 125
      %v686 = vpop.permute.xlu0 %685
      %687 = vrot.lane.b32.xlu0 %v682, 125
      %v688 = vpop.permute.xlu0 %687
      %v691 = vadd.f32 %v668, %v686
      %v692 = vadd.f32 %v669, %v688
      %s693 = scalar_lea.vmem %s2, 128
      %v694 = vld [vmem:[%s693] sm:$0xff]
      %v695 = vld [vmem:[%s693 + $0x8] sm:$0xff]
      %698 = vrot.lane.b32.xlu0 %v694, 4
      %v699 = vpop.permute.xlu0 %698
      %700 = vrot.lane.b32.xlu0 %v695, 4
      %v701 = vpop.permute.xlu0 %700
      %v704 = vmul.f32 %v540, %v699
      %v705 = vmul.f32 %v541, %v701
      %708 = vrot.lane.b32.xlu0 %v704, 124
      %v709 = vpop.permute.xlu0 %708
      %710 = vrot.lane.b32.xlu0 %v705, 124
      %v711 = vpop.permute.xlu0 %710
      %v714 = vadd.f32 %v691, %v709
      %v715 = vadd.f32 %v692, %v711
      %v716 = vld [vmem:[%s3] sm:$0xff]
      %v717 = vld [vmem:[%s3 + $0x8] sm:$0xff]
      %v718 = vadd.f32 %v714, %v716
      %v719 = vadd.f32 %v715, %v717
      %v720 = vmul.f32 %v718, 0.5
      %v721 = vmul.f32 %v719, 0.5
      %v722 = vmul.f32 %v718, 0.70710677
      %v723 = vmul.f32 %v719, 0.70710677
      %v724 = vand.u32 2147483647, %v722
      %v725 = vand.u32 2147483647, %v723
      %v726 = vmul.f32 %v724, 0.3275911
      %v727 = vmul.f32 %v725, 0.3275911
      %v728 = vadd.f32 %v726, 1.0
      %v729 = vadd.f32 %v727, 1.0
      %v730 = vrcp.pop %v728
      %v731 = vmul.f32 1.0, %v730
      %v732 = vrcp.pop %v729
      %v733 = vmul.f32 1.0, %v732
      %v734 = vmul.f32 %v731, 1.0614054
      %v735 = vmul.f32 %v733, 1.0614054
      %v736 = vadd.f32 %v734, -1.4531521
      %v737 = vadd.f32 %v735, -1.4531521
      %v738 = vmul.f32 %v731, %v736
      %v739 = vmul.f32 %v733, %v737
      %v740 = vadd.f32 %v738, 1.4214138
      %v741 = vadd.f32 %v739, 1.4214138
      %v742 = vmul.f32 %v731, %v740
      %v743 = vmul.f32 %v733, %v741
      %v744 = vadd.f32 %v742, -0.28449672
      %v745 = vadd.f32 %v743, -0.28449672
      %v746 = vmul.f32 %v731, %v744
      %v747 = vmul.f32 %v733, %v745
      %v748 = vadd.f32 %v746, 0.2548296
      %v749 = vadd.f32 %v747, 0.2548296
      %v750 = vmul.f32 %v731, %v748
      %v751 = vmul.f32 %v733, %v749
      %v752 = vsub.f32 0.0, %v724
      %v753 = vsub.f32 0.0, %v725
      %v754 = vmul.f32 %v752, %v724
      %v755 = vmul.f32 %v753, %v725
      %v756 = vmul.f32 %v754, 1.442695
      %v757 = vpow.pop %v756
      %v758 = vmul.f32 %v755, 1.442695
      %v759 = vpow.pop %v758
      %v760 = vmul.f32 %v750, %v757
      %v761 = vmul.f32 %v751, %v759
      %v762 = vsub.f32 1.0, %v760
      %v763 = vsub.f32 1.0, %v761
      %vm764 = vcmp.ge.f32.partialorder %v722, 0.0
      %vm765 = vcmp.ge.f32.partialorder %v723, 0.0
      %v766 = vsub.f32 0.0, %v762
      %v767 = vsub.f32 0.0, %v763
      %v768 = vsel %vm764, %v762, %v766
      %v769 = vsel %vm765, %v763, %v767
      %v770 = vadd.f32 %v768, 1.0
      %v771 = vadd.f32 %v769, 1.0
      %v772 = vmul.f32 %v720, %v770
      %v773 = vmul.f32 %v721, %v771
      %v774 = vld [vmem:[%s5] sm:$0xff]
      %v775 = vld [vmem:[%s5 + $0x8] sm:$0xff]
      %v776 = vld [vmem:[%s5 + $0x10] sm:$0xff]
      %v777 = vld [vmem:[%s5 + $0x18] sm:$0xff]
      %vm778 = vcmask 130048
      %v780 = vsel %vm778, %v774, 0
      %v783 = vsel %vm778, %v775, 0
      %v786 = vsel %vm778, %v776, 0
      %v789 = vsel %vm778, %v777, 0
      %791 = vmatprep.subr.mxu0 0.0
      %792 = vmatpush1.msra.mxu0 0.0
      %793 = vmatprep.subr.mxu0 0.0
      %794 = vmatpush1.msra.mxu0 0.0
      %795 = vmatprep.subr.mxu0 0.0
      %796 = vmatpush1.msra.mxu0 0.0
      %797 = vmatprep.subr.mxu0 0.0
      %798 = vmatpush1.msra.mxu0 0.0
      %799 = vmatprep.subr.mxu0 0.0
      %800 = vmatpush1.msra.mxu0 0.0
      %801 = vmatprep.subr.mxu0 0.0
      %802 = vmatpush1.msra.mxu0 0.0
      %803 = vmatprep.subr.mxu0 0.0
      %804 = vmatpush1.msra.mxu0 0.0
      %805 = vmatprep.subr.mxu0 0.0
      %806 = vmatpush1.msra.mxu0 0.0
      %807 = vmatprep.subr.mxu0 0.0
      %808 = vmatpush1.msra.mxu0 0.0
      %809 = vmatprep.subr.mxu0 0.0
      %810 = vmatpush1.msra.mxu0 0.0
      %811 = vmatprep.subr.mxu0 0.0
      %812 = vmatpush1.msra.mxu0 0.0
      %813 = vmatprep.subr.mxu0 0.0
      %814 = vmatpush1.msra.mxu0 0.0
      %815 = vmatprep.subr.mxu0 0.0
      %816 = vmatpush1.msra.mxu0 0.0
      %817 = vmatprep.subr.mxu0 0.0
      %818 = vmatpush1.msra.mxu0 0.0
      %819 = vmatprep.subr.mxu0 0.0
      %820 = vmatpush1.msra.mxu0 %v773
      %821 = vmatprep.subr.mxu0 0.0
      %822 = vmatpush1.msra.mxu0 %v772
      %823 = vmatprep.subr.mxu0 0.0
      %824 = vmatpush2.msra.mxu0 0.0
      %825 = vmatprep.subr.mxu0 0.0
      %826 = vmatpush2.msra.mxu0 0.0
      %827 = vmatprep.subr.mxu0 0.0
      %828 = vmatpush2.msra.mxu0 0.0
      %829 = vmatprep.subr.mxu0 0.0
      %830 = vmatpush2.msra.mxu0 0.0
      %831 = vmatprep.subr.mxu0 0.0
      %832 = vmatpush2.msra.mxu0 0.0
      %833 = vmatprep.subr.mxu0 0.0
      %834 = vmatpush2.msra.mxu0 0.0
      %835 = vmatprep.subr.mxu0 0.0
      %836 = vmatpush2.msra.mxu0 0.0
      %837 = vmatprep.subr.mxu0 0.0
      %838 = vmatpush2.msra.mxu0 0.0
      %839 = vmatprep.subr.mxu0 0.0
      %840 = vmatpush2.msra.mxu0 0.0
      %841 = vmatprep.subr.mxu0 0.0
      %842 = vmatpush2.msra.mxu0 0.0
      %843 = vmatprep.subr.mxu0 0.0
      %844 = vmatpush2.msra.mxu0 0.0
      %845 = vmatprep.subr.mxu0 0.0
      %846 = vmatpush2.msra.mxu0 0.0
      %847 = vmatprep.subr.mxu0 0.0
      %848 = vmatpush2.msra.mxu0 0.0
      %849 = vmatprep.subr.mxu0 0.0
      %850 = vmatpush2.msra.mxu0 0.0
      %851 = vmatprep.subr.mxu0 0.0
      %852 = vmatpush2.msra.mxu0 0.0
      %853 = vmatprep.subr.mxu0 0.0
      %854 = vmatpush2.msra.mxu0 0.0
      %855 = vmatprep.mubr.f32.mxu0 0.0
      %856 = vmatmul.mubr.f32.gmra.mxu0 %v780
      %v857 = vpop.f32.mrf.mxu0
      %v858 = vadd.f32 0.0, %v857
      %v859 = vpop.f32.mrf.mxu0
      %860 = vmatprep.mubr.f32.mxu0 0.0
      %861 = vmatmul.mubr.f32.gmra.mxu0 %v783
      %v862 = vpop.f32.mrf.mxu0
      %v863 = vadd.f32 0.0, %v862
      %v864 = vpop.f32.mrf.mxu0
      %865 = vmatprep.mubr.f32.mxu0 0.0
      %866 = vmatmul.mubr.f32.gmra.mxu0 %v786
      %v867 = vpop.f32.mrf.mxu0
      %v868 = vadd.f32 0.0, %v867
      %v869 = vpop.f32.mrf.mxu0
      %870 = vmatprep.mubr.f32.mxu0 0.0
      %871 = vmatmul.mubr.f32.gmra.mxu0 %v789
      %v872 = vpop.f32.mrf.mxu0
      %v873 = vadd.f32 0.0, %v872
      %v874 = vpop.f32.mrf.mxu0
      %875 = vdwg.mxu0
      %v876 = vld [vmem:[%s4] sm:$0xff]
      %v877 = vld [vmem:[%s4 + $0x8] sm:$0xff]
      %879 = vset.pattern.permute.xlu0 0
      %880 = vperm.xlu0 %879, %v876
      %v881 = vpop.permute.xlu0 %880
      %884 = vset.pattern.permute.xlu0 0
      %885 = vperm.xlu0 %884, %v877
      %v886 = vpop.permute.xlu0 %885
      %v888 = vadd.f32 %v858, %v881
      %v889 = vadd.f32 %v863, %v886
      %890 = vset.pattern.permute.xlu0 1
      %891 = vperm.xlu0 %890, %v876
      %v892 = vpop.permute.xlu0 %891
      %894 = vset.pattern.permute.xlu0 1
      %895 = vperm.xlu0 %894, %v877
      %v896 = vpop.permute.xlu0 %895
      %v898 = vadd.f32 %v868, %v892
      %v899 = vadd.f32 %v873, %v896
      %v900 = vmax.f32 %v898, 0.0
      %v901 = vmax.f32 %v899, 0.0
      %v902 = vadd.f32 %v888, 1.0
      %v903 = vadd.f32 %v889, 1.0
      %v904 = vmul.f32 %v900, %v902
      %v905 = vmul.f32 %v901, %v903
      %v906 = vld [vmem:[%s7] sm:$0xff]
      %vm907 = vcmask 64512
      %v909 = vsel %vm907, %v904, 0
      %v912 = vsel %vm907, %v905, 0
      %914 = vmatprep.subr.mxu0 0.0
      %915 = vmatpush1.msra.mxu0 0.0
      %916 = vmatprep.subr.mxu0 0.0
      %917 = vmatpush1.msra.mxu0 0.0
      %918 = vmatprep.subr.mxu0 0.0
      %919 = vmatpush1.msra.mxu0 0.0
      %920 = vmatprep.subr.mxu0 0.0
      %921 = vmatpush1.msra.mxu0 0.0
      %922 = vmatprep.subr.mxu0 0.0
      %923 = vmatpush1.msra.mxu0 0.0
      %924 = vmatprep.subr.mxu0 0.0
      %925 = vmatpush1.msra.mxu0 0.0
      %926 = vmatprep.subr.mxu0 0.0
      %927 = vmatpush1.msra.mxu0 0.0
      %928 = vmatprep.subr.mxu0 0.0
      %929 = vmatpush1.msra.mxu0 0.0
      %930 = vmatprep.subr.mxu0 0.0
      %931 = vmatpush1.msra.mxu0 0.0
      %932 = vmatprep.subr.mxu0 0.0
      %933 = vmatpush1.msra.mxu0 0.0
      %934 = vmatprep.subr.mxu0 0.0
      %935 = vmatpush1.msra.mxu0 0.0
      %936 = vmatprep.subr.mxu0 0.0
      %937 = vmatpush1.msra.mxu0 0.0
      %938 = vmatprep.subr.mxu0 0.0
      %939 = vmatpush1.msra.mxu0 0.0
      %940 = vmatprep.subr.mxu0 0.0
      %941 = vmatpush1.msra.mxu0 0.0
      %942 = vmatprep.subr.mxu0 0.0
      %943 = vmatpush1.msra.mxu0 0.0
      %944 = vmatprep.subr.mxu0 0.0
      %945 = vmatpush1.msra.mxu0 %v906
      %946 = vmatprep.subr.mxu0 0.0
      %947 = vmatpush2.msra.mxu0 0.0
      %948 = vmatprep.subr.mxu0 0.0
      %949 = vmatpush2.msra.mxu0 0.0
      %950 = vmatprep.subr.mxu0 0.0
      %951 = vmatpush2.msra.mxu0 0.0
      %952 = vmatprep.subr.mxu0 0.0
      %953 = vmatpush2.msra.mxu0 0.0
      %954 = vmatprep.subr.mxu0 0.0
      %955 = vmatpush2.msra.mxu0 0.0
      %956 = vmatprep.subr.mxu0 0.0
      %957 = vmatpush2.msra.mxu0 0.0
      %958 = vmatprep.subr.mxu0 0.0
      %959 = vmatpush2.msra.mxu0 0.0
      %960 = vmatprep.subr.mxu0 0.0
      %961 = vmatpush2.msra.mxu0 0.0
      %962 = vmatprep.subr.mxu0 0.0
      %963 = vmatpush2.msra.mxu0 0.0
      %964 = vmatprep.subr.mxu0 0.0
      %965 = vmatpush2.msra.mxu0 0.0
      %966 = vmatprep.subr.mxu0 0.0
      %967 = vmatpush2.msra.mxu0 0.0
      %968 = vmatprep.subr.mxu0 0.0
      %969 = vmatpush2.msra.mxu0 0.0
      %970 = vmatprep.subr.mxu0 0.0
      %971 = vmatpush2.msra.mxu0 0.0
      %972 = vmatprep.subr.mxu0 0.0
      %973 = vmatpush2.msra.mxu0 0.0
      %974 = vmatprep.subr.mxu0 0.0
      %975 = vmatpush2.msra.mxu0 0.0
      %976 = vmatprep.subr.mxu0 0.0
      %977 = vmatpush2.msra.mxu0 0.0
      %978 = vmatprep.mubr.f32.mxu0 0.0
      %979 = vmatmul.mubr.f32.gmra.mxu0 %v909
      %v980 = vpop.f32.mrf.mxu0
      %v981 = vadd.f32 0.0, %v980
      %v982 = vpop.f32.mrf.mxu0
      %983 = vmatprep.mubr.f32.mxu0 0.0
      %984 = vmatmul.mubr.f32.gmra.mxu0 %v912
      %v985 = vpop.f32.mrf.mxu0
      %v986 = vadd.f32 0.0, %v985
      %v987 = vpop.f32.mrf.mxu0
      %988 = vdwg.mxu0
      %v989 = vld [vmem:[%s8] sm:$0x1]
      %vm990 = vcmask 7168
      %v992 = vsel %vm990, %v981, 0
      %v995 = vsel %vm990, %v986, 0
      %vm997 = vcmask 1040384
      %v999 = vsel %vm997, %v989, 0
      %1001 = vmatprep.subr.mxu0 0.0
      %1002 = vmatpush1.msra.mxu0 0.0
      %1003 = vmatprep.subr.mxu0 0.0
      %1004 = vmatpush1.msra.mxu0 0.0
      %1005 = vmatprep.subr.mxu0 0.0
      %1006 = vmatpush1.msra.mxu0 0.0
      %1007 = vmatprep.subr.mxu0 0.0
      %1008 = vmatpush1.msra.mxu0 0.0
      %1009 = vmatprep.subr.mxu0 0.0
      %1010 = vmatpush1.msra.mxu0 0.0
      %1011 = vmatprep.subr.mxu0 0.0
      %1012 = vmatpush1.msra.mxu0 0.0
      %1013 = vmatprep.subr.mxu0 0.0
      %1014 = vmatpush1.msra.mxu0 0.0
      %1015 = vmatprep.subr.mxu0 0.0
      %1016 = vmatpush1.msra.mxu0 0.0
      %1017 = vmatprep.subr.mxu0 0.0
      %1018 = vmatpush1.msra.mxu0 0.0
      %1019 = vmatprep.subr.mxu0 0.0
      %1020 = vmatpush1.msra.mxu0 0.0
      %1021 = vmatprep.subr.mxu0 0.0
      %1022 = vmatpush1.msra.mxu0 0.0
      %1023 = vmatprep.subr.mxu0 0.0
      %1024 = vmatpush1.msra.mxu0 0.0
      %1025 = vmatprep.subr.mxu0 0.0
      %1026 = vmatpush1.msra.mxu0 0.0
      %1027 = vmatprep.subr.mxu0 0.0
      %1028 = vmatpush1.msra.mxu0 0.0
      %1029 = vmatprep.subr.mxu0 0.0
      %1030 = vmatpush1.msra.mxu0 0.0
      %1031 = vmatprep.subr.mxu0 0.0
      %1032 = vmatpush1.msra.mxu0 %v999
      %1033 = vmatprep.subr.mxu0 0.0
      %1034 = vmatpush2.msra.mxu0 0.0
      %1035 = vmatprep.subr.mxu0 0.0
      %1036 = vmatpush2.msra.mxu0 0.0
      %1037 = vmatprep.subr.mxu0 0.0
      %1038 = vmatpush2.msra.mxu0 0.0
      %1039 = vmatprep.subr.mxu0 0.0
      %1040 = vmatpush2.msra.mxu0 0.0
      %1041 = vmatprep.subr.mxu0 0.0
      %1042 = vmatpush2.msra.mxu0 0.0
      %1043 = vmatprep.subr.mxu0 0.0
      %1044 = vmatpush2.msra.mxu0 0.0
      %1045 = vmatprep.subr.mxu0 0.0
      %1046 = vmatpush2.msra.mxu0 0.0
      %1047 = vmatprep.subr.mxu0 0.0
      %1048 = vmatpush2.msra.mxu0 0.0
      %1049 = vmatprep.subr.mxu0 0.0
      %1050 = vmatpush2.msra.mxu0 0.0
      %1051 = vmatprep.subr.mxu0 0.0
      %1052 = vmatpush2.msra.mxu0 0.0
      %1053 = vmatprep.subr.mxu0 0.0
      %1054 = vmatpush2.msra.mxu0 0.0
      %1055 = vmatprep.subr.mxu0 0.0
      %1056 = vmatpush2.msra.mxu0 0.0
      %1057 = vmatprep.subr.mxu0 0.0
      %1058 = vmatpush2.msra.mxu0 0.0
      %1059 = vmatprep.subr.mxu0 0.0
      %1060 = vmatpush2.msra.mxu0 0.0
      %1061 = vmatprep.subr.mxu0 0.0
      %1062 = vmatpush2.msra.mxu0 0.0
      %1063 = vmatprep.subr.mxu0 0.0
      %1064 = vmatpush2.msra.mxu0 0.0
      %1065 = vmatprep.mubr.f32.mxu0 0.0
      %1066 = vmatmul.mubr.f32.gmra.mxu0 %v992
      %v1067 = vpop.f32.mrf.mxu0
      %v1068 = vadd.f32 0.0, %v1067
      %v1069 = vpop.f32.mrf.mxu0
      %1070 = vmatprep.mubr.f32.mxu0 0.0
      %1071 = vmatmul.mubr.f32.gmra.mxu0 %v995
      %v1072 = vpop.f32.mrf.mxu0
      %v1073 = vadd.f32 0.0, %v1072
      %v1074 = vpop.f32.mrf.mxu0
      %1075 = vdwg.mxu0
      %v1076 = vld [vmem:[%s6] sm:$0xff]
      %v1077 = vld [vmem:[%s6 + $0x8] sm:$0xff]
      %v1078 = vmul.f32 %v1068, %v900
      %v1079 = vmul.f32 %v1073, %v901
      %1080 = vset.pattern.permute.xlu0 2
      %1081 = vperm.xlu0 %1080, %v876
      %v1082 = vpop.permute.xlu0 %1081
      %1084 = vset.pattern.permute.xlu0 2
      %1085 = vperm.xlu0 %1084, %v877
      %v1086 = vpop.permute.xlu0 %1085
      %v1089 = vsel %vm778, %v1076, 0
      %v1092 = vsel %vm778, %v1077, 0
      %1094 = vmatprep.subr.mxu0 0.0
      %1095 = vmatpush1.msra.mxu0 0.0
      %1096 = vmatprep.subr.mxu0 0.0
      %1097 = vmatpush1.msra.mxu0 0.0
      %1098 = vmatprep.subr.mxu0 0.0
      %1099 = vmatpush1.msra.mxu0 0.0
      %1100 = vmatprep.subr.mxu0 0.0
      %1101 = vmatpush1.msra.mxu0 0.0
      %1102 = vmatprep.subr.mxu0 0.0
      %1103 = vmatpush1.msra.mxu0 0.0
      %1104 = vmatprep.subr.mxu0 0.0
      %1105 = vmatpush1.msra.mxu0 0.0
      %1106 = vmatprep.subr.mxu0 0.0
      %1107 = vmatpush1.msra.mxu0 0.0
      %1108 = vmatprep.subr.mxu0 0.0
      %1109 = vmatpush1.msra.mxu0 0.0
      %1110 = vmatprep.subr.mxu0 0.0
      %1111 = vmatpush1.msra.mxu0 0.0
      %1112 = vmatprep.subr.mxu0 0.0
      %1113 = vmatpush1.msra.mxu0 0.0
      %1114 = vmatprep.subr.mxu0 0.0
      %1115 = vmatpush1.msra.mxu0 0.0
      %1116 = vmatprep.subr.mxu0 0.0
      %1117 = vmatpush1.msra.mxu0 0.0
      %1118 = vmatprep.subr.mxu0 0.0
      %1119 = vmatpush1.msra.mxu0 0.0
      %1120 = vmatprep.subr.mxu0 0.0
      %1121 = vmatpush1.msra.mxu0 0.0
      %1122 = vmatprep.subr.mxu0 0.0
      %1123 = vmatpush1.msra.mxu0 %v1079
      %1124 = vmatprep.subr.mxu0 0.0
      %1125 = vmatpush1.msra.mxu0 %v1078
      %1126 = vmatprep.subr.mxu0 0.0
      %1127 = vmatpush2.msra.mxu0 0.0
      %1128 = vmatprep.subr.mxu0 0.0
      %1129 = vmatpush2.msra.mxu0 0.0
      %1130 = vmatprep.subr.mxu0 0.0
      %1131 = vmatpush2.msra.mxu0 0.0
      %1132 = vmatprep.subr.mxu0 0.0
      %1133 = vmatpush2.msra.mxu0 0.0
      %1134 = vmatprep.subr.mxu0 0.0
      %1135 = vmatpush2.msra.mxu0 0.0
      %1136 = vmatprep.subr.mxu0 0.0
      %1137 = vmatpush2.msra.mxu0 0.0
      %1138 = vmatprep.subr.mxu0 0.0
      %1139 = vmatpush2.msra.mxu0 0.0
      %1140 = vmatprep.subr.mxu0 0.0
      %1141 = vmatpush2.msra.mxu0 0.0
      %1142 = vmatprep.subr.mxu0 0.0
      %1143 = vmatpush2.msra.mxu0 0.0
      %1144 = vmatprep.subr.mxu0 0.0
      %1145 = vmatpush2.msra.mxu0 0.0
      %1146 = vmatprep.subr.mxu0 0.0
      %1147 = vmatpush2.msra.mxu0 0.0
      %1148 = vmatprep.subr.mxu0 0.0
      %1149 = vmatpush2.msra.mxu0 0.0
      %1150 = vmatprep.subr.mxu0 0.0
      %1151 = vmatpush2.msra.mxu0 0.0
      %1152 = vmatprep.subr.mxu0 0.0
      %1153 = vmatpush2.msra.mxu0 0.0
      %1154 = vmatprep.subr.mxu0 0.0
      %1155 = vmatpush2.msra.mxu0 0.0
      %1156 = vmatprep.subr.mxu0 0.0
      %1157 = vmatpush2.msra.mxu0 0.0
      %1158 = vmatprep.mubr.f32.mxu0 0.0
      %1159 = vmatmul.mubr.f32.gmra.mxu0 %v1089
      %v1160 = vpop.f32.mrf.mxu0
      %v1161 = vadd.f32 %v1082, %v1160
      %v1162 = vpop.f32.mrf.mxu0
      %1163 = vmatprep.mubr.f32.mxu0 0.0
      %1164 = vmatmul.mubr.f32.gmra.mxu0 %v1092
      %v1165 = vpop.f32.mrf.mxu0
      %v1166 = vadd.f32 %v1086, %v1165
      %v1167 = vpop.f32.mrf.mxu0
      %1168 = vdwg.mxu0
      %v1170 = vsel %vm907, %v1161, 0
      %v1173 = vsel %vm907, %v1166, 0
      %1175 = vmatprep.subr.mxu0 0.0
      %1176 = vmatpush1.msra.mxu0 0.0
      %1177 = vmatprep.subr.mxu0 0.0
      %1178 = vmatpush1.msra.mxu0 0.0
      %1179 = vmatprep.subr.mxu0 0.0
      %1180 = vmatpush1.msra.mxu0 0.0
      %1181 = vmatprep.subr.mxu0 0.0
      %1182 = vmatpush1.msra.mxu0 0.0
      %1183 = vmatprep.subr.mxu0 0.0
      %1184 = vmatpush1.msra.mxu0 0.0
      %1185 = vmatprep.subr.mxu0 0.0
      %1186 = vmatpush1.msra.mxu0 0.0
      %1187 = vmatprep.subr.mxu0 0.0
      %1188 = vmatpush1.msra.mxu0 0.0
      %1189 = vmatprep.subr.mxu0 0.0
      %1190 = vmatpush1.msra.mxu0 0.0
      %1191 = vmatprep.subr.mxu0 0.0
      %1192 = vmatpush1.msra.mxu0 0.0
      %1193 = vmatprep.subr.mxu0 0.0
      %1194 = vmatpush1.msra.mxu0 0.0
      %1195 = vmatprep.subr.mxu0 0.0
      %1196 = vmatpush1.msra.mxu0 0.0
      %1197 = vmatprep.subr.mxu0 0.0
      %1198 = vmatpush1.msra.mxu0 0.0
      %1199 = vmatprep.subr.mxu0 0.0
      %1200 = vmatpush1.msra.mxu0 0.0
      %1201 = vmatprep.subr.mxu0 0.0
      %1202 = vmatpush1.msra.mxu0 0.0
      %1203 = vmatprep.subr.mxu0 0.0
      %1204 = vmatpush1.msra.mxu0 0.0
      %1205 = vmatprep.subr.mxu0 0.0
      %1206 = vmatpush1.msra.mxu0 %v906
      %1207 = vmatprep.subr.mxu0 0.0
      %1208 = vmatpush2.msra.mxu0 0.0
      %1209 = vmatprep.subr.mxu0 0.0
      %1210 = vmatpush2.msra.mxu0 0.0
      %1211 = vmatprep.subr.mxu0 0.0
      %1212 = vmatpush2.msra.mxu0 0.0
      %1213 = vmatprep.subr.mxu0 0.0
      %1214 = vmatpush2.msra.mxu0 0.0
      %1215 = vmatprep.subr.mxu0 0.0
      %1216 = vmatpush2.msra.mxu0 0.0
      %1217 = vmatprep.subr.mxu0 0.0
      %1218 = vmatpush2.msra.mxu0 0.0
      %1219 = vmatprep.subr.mxu0 0.0
      %1220 = vmatpush2.msra.mxu0 0.0
      %1221 = vmatprep.subr.mxu0 0.0
      %1222 = vmatpush2.msra.mxu0 0.0
      %1223 = vmatprep.subr.mxu0 0.0
      %1224 = vmatpush2.msra.mxu0 0.0
      %1225 = vmatprep.subr.mxu0 0.0
      %1226 = vmatpush2.msra.mxu0 0.0
      %1227 = vmatprep.subr.mxu0 0.0
      %1228 = vmatpush2.msra.mxu0 0.0
      %1229 = vmatprep.subr.mxu0 0.0
      %1230 = vmatpush2.msra.mxu0 0.0
      %1231 = vmatprep.subr.mxu0 0.0
      %1232 = vmatpush2.msra.mxu0 0.0
      %1233 = vmatprep.subr.mxu0 0.0
      %1234 = vmatpush2.msra.mxu0 0.0
      %1235 = vmatprep.subr.mxu0 0.0
      %1236 = vmatpush2.msra.mxu0 0.0
      %1237 = vmatprep.subr.mxu0 0.0
      %1238 = vmatpush2.msra.mxu0 0.0
      %1239 = vmatprep.mubr.f32.mxu0 0.0
      %1240 = vmatmul.mubr.f32.gmra.mxu0 %v1170
      %v1241 = vpop.f32.mrf.mxu0
      %v1242 = vadd.f32 0.0, %v1241
      %v1243 = vpop.f32.mrf.mxu0
      %1244 = vmatprep.mubr.f32.mxu0 0.0
      %1245 = vmatmul.mubr.f32.gmra.mxu0 %v1173
      %v1246 = vpop.f32.mrf.mxu0
      %v1247 = vadd.f32 0.0, %v1246
      %v1248 = vpop.f32.mrf.mxu0
      %1249 = vdwg.mxu0
      %v1250 = vmul.f32 %v1161, %v1161
      %v1251 = vmul.f32 %v1166, %v1166
      %v1253 = vsel %vm907, %v1250, 0
      %v1256 = vsel %vm907, %v1251, 0
      %1258 = vmatprep.subr.mxu0 0.0
      %1259 = vmatpush1.msra.mxu0 0.0
      %1260 = vmatprep.subr.mxu0 0.0
      %1261 = vmatpush1.msra.mxu0 0.0
      %1262 = vmatprep.subr.mxu0 0.0
      %1263 = vmatpush1.msra.mxu0 0.0
      %1264 = vmatprep.subr.mxu0 0.0
      %1265 = vmatpush1.msra.mxu0 0.0
      %1266 = vmatprep.subr.mxu0 0.0
      %1267 = vmatpush1.msra.mxu0 0.0
      %1268 = vmatprep.subr.mxu0 0.0
      %1269 = vmatpush1.msra.mxu0 0.0
      %1270 = vmatprep.subr.mxu0 0.0
      %1271 = vmatpush1.msra.mxu0 0.0
      %1272 = vmatprep.subr.mxu0 0.0
      %1273 = vmatpush1.msra.mxu0 0.0
      %1274 = vmatprep.subr.mxu0 0.0
      %1275 = vmatpush1.msra.mxu0 0.0
      %1276 = vmatprep.subr.mxu0 0.0
      %1277 = vmatpush1.msra.mxu0 0.0
      %1278 = vmatprep.subr.mxu0 0.0
      %1279 = vmatpush1.msra.mxu0 0.0
      %1280 = vmatprep.subr.mxu0 0.0
      %1281 = vmatpush1.msra.mxu0 0.0
      %1282 = vmatprep.subr.mxu0 0.0
      %1283 = vmatpush1.msra.mxu0 0.0
      %1284 = vmatprep.subr.mxu0 0.0
      %1285 = vmatpush1.msra.mxu0 0.0
      %1286 = vmatprep.subr.mxu0 0.0
      %1287 = vmatpush1.msra.mxu0 0.0
      %1288 = vmatprep.subr.mxu0 0.0
      %1289 = vmatpush1.msra.mxu0 %v906
      %1290 = vmatprep.subr.mxu0 0.0
      %1291 = vmatpush2.msra.mxu0 0.0
      %1292 = vmatprep.subr.mxu0 0.0
      %1293 = vmatpush2.msra.mxu0 0.0
      %1294 = vmatprep.subr.mxu0 0.0
      %1295 = vmatpush2.msra.mxu0 0.0
      %1296 = vmatprep.subr.mxu0 0.0
      %1297 = vmatpush2.msra.mxu0 0.0
      %1298 = vmatprep.subr.mxu0 0.0
      %1299 = vmatpush2.msra.mxu0 0.0
      %1300 = vmatprep.subr.mxu0 0.0
      %1301 = vmatpush2.msra.mxu0 0.0
      %1302 = vmatprep.subr.mxu0 0.0
      %1303 = vmatpush2.msra.mxu0 0.0
      %1304 = vmatprep.subr.mxu0 0.0
      %1305 = vmatpush2.msra.mxu0 0.0
      %1306 = vmatprep.subr.mxu0 0.0
      %1307 = vmatpush2.msra.mxu0 0.0
      %1308 = vmatprep.subr.mxu0 0.0
      %1309 = vmatpush2.msra.mxu0 0.0
      %1310 = vmatprep.subr.mxu0 0.0
      %1311 = vmatpush2.msra.mxu0 0.0
      %1312 = vmatprep.subr.mxu0 0.0
      %1313 = vmatpush2.msra.mxu0 0.0
      %1314 = vmatprep.subr.mxu0 0.0
      %1315 = vmatpush2.msra.mxu0 0.0
      %1316 = vmatprep.subr.mxu0 0.0
      %1317 = vmatpush2.msra.mxu0 0.0
      %1318 = vmatprep.subr.mxu0 0.0
      %1319 = vmatpush2.msra.mxu0 0.0
      %1320 = vmatprep.subr.mxu0 0.0
      %1321 = vmatpush2.msra.mxu0 0.0
      %1322 = vmatprep.mubr.f32.mxu0 0.0
      %1323 = vmatmul.mubr.f32.gmra.mxu0 %v1253
      %v1324 = vpop.f32.mrf.mxu0
      %v1325 = vadd.f32 0.0, %v1324
      %v1326 = vpop.f32.mrf.mxu0
      %1327 = vmatprep.mubr.f32.mxu0 0.0
      %1328 = vmatmul.mubr.f32.gmra.mxu0 %v1256
      %v1329 = vpop.f32.mrf.mxu0
      %v1330 = vadd.f32 0.0, %v1329
      %v1331 = vpop.f32.mrf.mxu0
      %1332 = vdwg.mxu0
      %v1333 = vmul.f32 %v1242, %v1242
      %v1334 = vmul.f32 %v1247, %v1247
      %v1335 = vsub.f32 %v1325, %v1333
      %v1336 = vsub.f32 %v1330, %v1334
      %v1337 = vmax.f32 %v1335, 0.0
      %v1338 = vmax.f32 %v1336, 0.0
      %v1339 = vadd.f32 %v1337, 1e-06
      %v1340 = vadd.f32 %v1338, 1e-06
      %v1341 = vrsqrt.pop %v1339
      %v1342 = vrsqrt.pop %v1340
      %v1343 = vsub.f32 0.0, %v1242
      %v1344 = vsub.f32 0.0, %v1247
      %v1345 = vmul.f32 %v1343, %v1341
      %v1346 = vmul.f32 %v1344, %v1342
      %v1348 = vsel %vm990, %v1341, 0
      %v1351 = vsel %vm990, %v1342, 0
      %v1354 = vsel %vm990, %v1345, 0
      %v1357 = vsel %vm990, %v1346, 0
      %1359 = vmatprep.subr.mxu0 0.0
      %1360 = vmatpush1.msra.mxu0 0.0
      %1361 = vmatprep.subr.mxu0 0.0
      %1362 = vmatpush1.msra.mxu0 0.0
      %1363 = vmatprep.subr.mxu0 0.0
      %1364 = vmatpush1.msra.mxu0 0.0
      %1365 = vmatprep.subr.mxu0 0.0
      %1366 = vmatpush1.msra.mxu0 0.0
      %1367 = vmatprep.subr.mxu0 0.0
      %1368 = vmatpush1.msra.mxu0 0.0
      %1369 = vmatprep.subr.mxu0 0.0
      %1370 = vmatpush1.msra.mxu0 0.0
      %1371 = vmatprep.subr.mxu0 0.0
      %1372 = vmatpush1.msra.mxu0 0.0
      %1373 = vmatprep.subr.mxu0 0.0
      %1374 = vmatpush1.msra.mxu0 0.0
      %1375 = vmatprep.subr.mxu0 0.0
      %1376 = vmatpush1.msra.mxu0 0.0
      %1377 = vmatprep.subr.mxu0 0.0
      %1378 = vmatpush1.msra.mxu0 0.0
      %1379 = vmatprep.subr.mxu0 0.0
      %1380 = vmatpush1.msra.mxu0 0.0
      %1381 = vmatprep.subr.mxu0 0.0
      %1382 = vmatpush1.msra.mxu0 0.0
      %1383 = vmatprep.subr.mxu0 0.0
      %1384 = vmatpush1.msra.mxu0 0.0
      %1385 = vmatprep.subr.mxu0 0.0
      %1386 = vmatpush1.msra.mxu0 0.0
      %1387 = vmatprep.subr.mxu0 0.0
      %1388 = vmatpush1.msra.mxu0 0.0
      %1389 = vmatprep.subr.mxu0 0.0
      %1390 = vmatpush1.msra.mxu0 %v999
      %1391 = vmatprep.subr.mxu0 0.0
      %1392 = vmatpush2.msra.mxu0 0.0
      %1393 = vmatprep.subr.mxu0 0.0
      %1394 = vmatpush2.msra.mxu0 0.0
      %1395 = vmatprep.subr.mxu0 0.0
      %1396 = vmatpush2.msra.mxu0 0.0
      %1397 = vmatprep.subr.mxu0 0.0
      %1398 = vmatpush2.msra.mxu0 0.0
      %1399 = vmatprep.subr.mxu0 0.0
      %1400 = vmatpush2.msra.mxu0 0.0
      %1401 = vmatprep.subr.mxu0 0.0
      %1402 = vmatpush2.msra.mxu0 0.0
      %1403 = vmatprep.subr.mxu0 0.0
      %1404 = vmatpush2.msra.mxu0 0.0
      %1405 = vmatprep.subr.mxu0 0.0
      %1406 = vmatpush2.msra.mxu0 0.0
      %1407 = vmatprep.subr.mxu0 0.0
      %1408 = vmatpush2.msra.mxu0 0.0
      %1409 = vmatprep.subr.mxu0 0.0
      %1410 = vmatpush2.msra.mxu0 0.0
      %1411 = vmatprep.subr.mxu0 0.0
      %1412 = vmatpush2.msra.mxu0 0.0
      %1413 = vmatprep.subr.mxu0 0.0
      %1414 = vmatpush2.msra.mxu0 0.0
      %1415 = vmatprep.subr.mxu0 0.0
      %1416 = vmatpush2.msra.mxu0 0.0
      %1417 = vmatprep.subr.mxu0 0.0
      %1418 = vmatpush2.msra.mxu0 0.0
      %1419 = vmatprep.subr.mxu0 0.0
      %1420 = vmatpush2.msra.mxu0 0.0
      %1421 = vmatprep.subr.mxu0 0.0
      %1422 = vmatpush2.msra.mxu0 0.0
      %1423 = vmatprep.mubr.f32.mxu0 0.0
      %1424 = vmatmul.mubr.f32.gmra.mxu0 %v1348
      %v1425 = vpop.f32.mrf.mxu0
      %v1426 = vadd.f32 0.0, %v1425
      %v1427 = vpop.f32.mrf.mxu0
      %1428 = vmatprep.mubr.f32.mxu0 0.0
      %1429 = vmatmul.mubr.f32.gmra.mxu0 %v1351
      %v1430 = vpop.f32.mrf.mxu0
      %v1431 = vadd.f32 0.0, %v1430
      %v1432 = vpop.f32.mrf.mxu0
      %1433 = vmatprep.mubr.f32.mxu0 0.0
      %1434 = vmatmul.mubr.f32.gmra.mxu0 %v1354
      %v1435 = vpop.f32.mrf.mxu0
      %v1436 = vadd.f32 0.0, %v1435
      %v1437 = vpop.f32.mrf.mxu0
      %1438 = vmatprep.mubr.f32.mxu0 0.0
      %1439 = vmatmul.mubr.f32.gmra.mxu0 %v1357
      %v1440 = vpop.f32.mrf.mxu0
      %v1441 = vadd.f32 0.0, %v1440
      %v1442 = vpop.f32.mrf.mxu0
      %1443 = vdwg.mxu0
      %v1444 = vmul.f32 %v1161, %v1426
      %v1445 = vmul.f32 %v1166, %v1431
      %v1446 = vadd.f32 %v1444, %v1436
      %v1447 = vadd.f32 %v1445, %v1441
      %v1448 = vld [vmem:[%s12] sm:$0x1]
      %v1449 = vlaneseq
      %v1450 = vshrl.u32 %v1449, 7
      %v1451 = vsub.s32 0, %v1450
      %v1452 = vrot.slane %v1448, %v1451
      %v1453 = vmul.f32 %v1446, %v1452
      %v1454 = vmul.f32 %v1447, %v1452
      %v1455 = vld [vmem:[%s12 + $0x1] sm:$0x1]
      %v1456 = vlaneseq
      %v1457 = vshrl.u32 %v1456, 7
      %v1458 = vsub.s32 0, %v1457
      %v1459 = vrot.slane %v1455, %v1458
      %v1460 = vadd.f32 %v1453, %v1459
      %v1461 = vadd.f32 %v1454, %v1459
      %v1462 = vadd.f32 %v1460, %v772
      %v1463 = vadd.f32 %v1461, %v773
      %v1464 = vpack.c.bf16 %v1463, %v1462
      %v1465 = vld [vmem:[%s9] sm:$0xf]
      %v1466 = vld [vmem:[%s10] sm:$0x1]
      %v1468 = vlaneseq
      %v1469 = vshrl.u32 %v1468, 7
      %v1470 = vsub.s32 0, %v1469
      %v1471 = vrot.slane %v1466, %v1470
      %v1474 = vsel %vm907, %v1464, 0
      %v1477 = vsel %vm454, %v1465, 0
      %1479 = vmatprep.subr.bf16.mxu0 0
      %1480 = vmatpush1.bf16.msra.mxu0 0
      %1481 = vmatprep.subr.bf16.mxu0 0
      %1482 = vmatpush1.bf16.msra.mxu0 0
      %1483 = vmatprep.subr.bf16.mxu0 0
      %1484 = vmatpush1.bf16.msra.mxu0 0
      %1485 = vmatprep.subr.bf16.mxu0 0
      %1486 = vmatpush1.bf16.msra.mxu0 0
      %1487 = vmatprep.subr.bf16.mxu0 0
      %1488 = vmatpush1.bf16.msra.mxu0 0
      %1489 = vmatprep.subr.bf16.mxu0 0
      %1490 = vmatpush1.bf16.msra.mxu0 0
      %1491 = vmatprep.subr.bf16.mxu0 0
      %1492 = vmatpush1.bf16.msra.mxu0 0
      %1493 = vmatprep.subr.bf16.mxu0 0
      %1494 = vmatpush1.bf16.msra.mxu0 %v1477
      %1495 = vmatprep.subr.bf16.mxu0 0
      %1496 = vmatpush2.bf16.msra.mxu0 0
      %1497 = vmatprep.subr.bf16.mxu0 0
      %1498 = vmatpush2.bf16.msra.mxu0 0
      %1499 = vmatprep.subr.bf16.mxu0 0
      %1500 = vmatpush2.bf16.msra.mxu0 0
      %1501 = vmatprep.subr.bf16.mxu0 0
      %1502 = vmatpush2.bf16.msra.mxu0 0
      %1503 = vmatprep.subr.bf16.mxu0 0
      %1504 = vmatpush2.bf16.msra.mxu0 0
      %1505 = vmatprep.subr.bf16.mxu0 0
      %1506 = vmatpush2.bf16.msra.mxu0 0
      %1507 = vmatprep.subr.bf16.mxu0 0
      %1508 = vmatpush2.bf16.msra.mxu0 0
      %1509 = vmatprep.subr.bf16.mxu0 0
      %1510 = vmatpush2.bf16.msra.mxu0 0
      %1511 = vmatprep.mubr.bf16.mxu0 0
      %1512 = vmatmul.mubr.bf16.gmra.mxu0 %v1474
      %v1513 = vpop.f32.mrf.mxu0
      %v1514 = vadd.f32 %v1471, %v1513
      %v1515 = vpop.f32.mrf.mxu0
      %v1516 = vpop.f32.mrf.mxu0
      %v1517 = vadd.f32 %v1471, %v1516
      %v1518 = vpop.f32.mrf.mxu0
      %1519 = vdwg.mxu0
      %v1520 = vmax.f32 %v1514, 0.0
      %v1521 = vmax.f32 %v1517, 0.0
      %v1522 = vpack.c.bf16 %v1521, %v1520
      %v1523 = vld [vmem:[%s11] sm:$0x1]
      %v1524 = vld [vmem:[%s12 + $0x4] sm:$0x1]
      %v1525 = vlaneseq
      %v1526 = vshrl.u32 %v1525, 7
      %v1527 = vsub.s32 0, %v1526
      %v1528 = vrot.slane %v1524, %v1527
      %vm1529 = vcmask 15360
      %v1531 = vsel %vm1529, %v1522, 0
      %v1534 = vsel %vm997, %v1523, 0
      %1536 = vmatprep.subr.bf16.mxu0 0
      %1537 = vmatpush1.bf16.msra.mxu0 0
      %1538 = vmatprep.subr.bf16.mxu0 0
      %1539 = vmatpush1.bf16.msra.mxu0 0
      %1540 = vmatprep.subr.bf16.mxu0 0
      %1541 = vmatpush1.bf16.msra.mxu0 0
      %1542 = vmatprep.subr.bf16.mxu0 0
      %1543 = vmatpush1.bf16.msra.mxu0 0
      %1544 = vmatprep.subr.bf16.mxu0 0
      %1545 = vmatpush1.bf16.msra.mxu0 0
      %1546 = vmatprep.subr.bf16.mxu0 0
      %1547 = vmatpush1.bf16.msra.mxu0 0
      %1548 = vmatprep.subr.bf16.mxu0 0
      %1549 = vmatpush1.bf16.msra.mxu0 0
      %1550 = vmatprep.subr.bf16.mxu0 0
      %1551 = vmatpush1.bf16.msra.mxu0 %v1534
      %1552 = vmatprep.subr.bf16.mxu0 0
      %1553 = vmatpush2.bf16.msra.mxu0 0
      %1554 = vmatprep.subr.bf16.mxu0 0
      %1555 = vmatpush2.bf16.msra.mxu0 0
      %1556 = vmatprep.subr.bf16.mxu0 0
      %1557 = vmatpush2.bf16.msra.mxu0 0
      %1558 = vmatprep.subr.bf16.mxu0 0
      %1559 = vmatpush2.bf16.msra.mxu0 0
      %1560 = vmatprep.subr.bf16.mxu0 0
      %1561 = vmatpush2.bf16.msra.mxu0 0
      %1562 = vmatprep.subr.bf16.mxu0 0
      %1563 = vmatpush2.bf16.msra.mxu0 0
      %1564 = vmatprep.subr.bf16.mxu0 0
      %1565 = vmatpush2.bf16.msra.mxu0 0
      %1566 = vmatprep.subr.bf16.mxu0 0
      %1567 = vmatpush2.bf16.msra.mxu0 0
      %1568 = vmatprep.mubr.bf16.mxu0 0
      %1569 = vmatmul.mubr.bf16.gmra.mxu0 %v1531
      %v1570 = vpop.f32.mrf.mxu0
      %v1571 = vadd.f32 %v1528, %v1570
      %v1572 = vpop.f32.mrf.mxu0
      %v1573 = vpop.f32.mrf.mxu0
      %v1574 = vadd.f32 %v1528, %v1573
      %v1575 = vpop.f32.mrf.mxu0
      %1576 = vdwg.mxu0
      %v1578 = vsel %vm907, %v1571, 0
      %v1581 = vsel %vm907, %v1574, 0
      %1583 = vmatprep.subr.mxu0 0.0
      %1584 = vmatpush1.msra.mxu0 0.0
      %1585 = vmatprep.subr.mxu0 0.0
      %1586 = vmatpush1.msra.mxu0 0.0
      %1587 = vmatprep.subr.mxu0 0.0
      %1588 = vmatpush1.msra.mxu0 0.0
      %1589 = vmatprep.subr.mxu0 0.0
      %1590 = vmatpush1.msra.mxu0 0.0
      %1591 = vmatprep.subr.mxu0 0.0
      %1592 = vmatpush1.msra.mxu0 0.0
      %1593 = vmatprep.subr.mxu0 0.0
      %1594 = vmatpush1.msra.mxu0 0.0
      %1595 = vmatprep.subr.mxu0 0.0
      %1596 = vmatpush1.msra.mxu0 0.0
      %1597 = vmatprep.subr.mxu0 0.0
      %1598 = vmatpush1.msra.mxu0 0.0
      %1599 = vmatprep.subr.mxu0 0.0
      %1600 = vmatpush1.msra.mxu0 0.0
      %1601 = vmatprep.subr.mxu0 0.0
      %1602 = vmatpush1.msra.mxu0 0.0
      %1603 = vmatprep.subr.mxu0 0.0
      %1604 = vmatpush1.msra.mxu0 0.0
      %1605 = vmatprep.subr.mxu0 0.0
      %1606 = vmatpush1.msra.mxu0 0.0
      %1607 = vmatprep.subr.mxu0 0.0
      %1608 = vmatpush1.msra.mxu0 0.0
      %1609 = vmatprep.subr.mxu0 0.0
      %1610 = vmatpush1.msra.mxu0 0.0
      %1611 = vmatprep.subr.mxu0 0.0
      %1612 = vmatpush1.msra.mxu0 0.0
      %1613 = vmatprep.subr.mxu0 0.0
      %1614 = vmatpush1.msra.mxu0 %v906
      %1615 = vmatprep.subr.mxu0 0.0
      %1616 = vmatpush2.msra.mxu0 0.0
      %1617 = vmatprep.subr.mxu0 0.0
      %1618 = vmatpush2.msra.mxu0 0.0
      %1619 = vmatprep.subr.mxu0 0.0
      %1620 = vmatpush2.msra.mxu0 0.0
      %1621 = vmatprep.subr.mxu0 0.0
      %1622 = vmatpush2.msra.mxu0 0.0
      %1623 = vmatprep.subr.mxu0 0.0
      %1624 = vmatpush2.msra.mxu0 0.0
      %1625 = vmatprep.subr.mxu0 0.0
      %1626 = vmatpush2.msra.mxu0 0.0
      %1627 = vmatprep.subr.mxu0 0.0
      %1628 = vmatpush2.msra.mxu0 0.0
      %1629 = vmatprep.subr.mxu0 0.0
      %1630 = vmatpush2.msra.mxu0 0.0
      %1631 = vmatprep.subr.mxu0 0.0
      %1632 = vmatpush2.msra.mxu0 0.0
      %1633 = vmatprep.subr.mxu0 0.0
      %1634 = vmatpush2.msra.mxu0 0.0
      %1635 = vmatprep.subr.mxu0 0.0
      %1636 = vmatpush2.msra.mxu0 0.0
      %1637 = vmatprep.subr.mxu0 0.0
      %1638 = vmatpush2.msra.mxu0 0.0
      %1639 = vmatprep.subr.mxu0 0.0
      %1640 = vmatpush2.msra.mxu0 0.0
      %1641 = vmatprep.subr.mxu0 0.0
      %1642 = vmatpush2.msra.mxu0 0.0
      %1643 = vmatprep.subr.mxu0 0.0
      %1644 = vmatpush2.msra.mxu0 0.0
      %1645 = vmatprep.subr.mxu0 0.0
      %1646 = vmatpush2.msra.mxu0 0.0
      %1647 = vmatprep.mubr.f32.mxu0 0.0
      %1648 = vmatmul.mubr.f32.gmra.mxu0 %v1578
      %v1649 = vpop.f32.mrf.mxu0
      %v1650 = vadd.f32 0.0, %v1649
      %v1651 = vpop.f32.mrf.mxu0
      %1652 = vmatprep.mubr.f32.mxu0 0.0
      %1653 = vmatmul.mubr.f32.gmra.mxu0 %v1581
      %v1654 = vpop.f32.mrf.mxu0
      %v1655 = vadd.f32 0.0, %v1654
      %v1656 = vpop.f32.mrf.mxu0
      %1657 = vdwg.mxu0
      %v1658 = vmul.f32 %v1571, %v1571
      %v1659 = vmul.f32 %v1574, %v1574
      %v1661 = vsel %vm907, %v1658, 0
      %v1664 = vsel %vm907, %v1659, 0
      %1666 = vmatprep.subr.mxu0 0.0
      %1667 = vmatpush1.msra.mxu0 0.0
      %1668 = vmatprep.subr.mxu0 0.0
      %1669 = vmatpush1.msra.mxu0 0.0
      %1670 = vmatprep.subr.mxu0 0.0
      %1671 = vmatpush1.msra.mxu0 0.0
      %1672 = vmatprep.subr.mxu0 0.0
      %1673 = vmatpush1.msra.mxu0 0.0
      %1674 = vmatprep.subr.mxu0 0.0
      %1675 = vmatpush1.msra.mxu0 0.0
      %1676 = vmatprep.subr.mxu0 0.0
      %1677 = vmatpush1.msra.mxu0 0.0
      %1678 = vmatprep.subr.mxu0 0.0
      %1679 = vmatpush1.msra.mxu0 0.0
      %1680 = vmatprep.subr.mxu0 0.0
      %1681 = vmatpush1.msra.mxu0 0.0
      %1682 = vmatprep.subr.mxu0 0.0
      %1683 = vmatpush1.msra.mxu0 0.0
      %1684 = vmatprep.subr.mxu0 0.0
      %1685 = vmatpush1.msra.mxu0 0.0
      %1686 = vmatprep.subr.mxu0 0.0
      %1687 = vmatpush1.msra.mxu0 0.0
      %1688 = vmatprep.subr.mxu0 0.0
      %1689 = vmatpush1.msra.mxu0 0.0
      %1690 = vmatprep.subr.mxu0 0.0
      %1691 = vmatpush1.msra.mxu0 0.0
      %1692 = vmatprep.subr.mxu0 0.0
      %1693 = vmatpush1.msra.mxu0 0.0
      %1694 = vmatprep.subr.mxu0 0.0
      %1695 = vmatpush1.msra.mxu0 0.0
      %1696 = vmatprep.subr.mxu0 0.0
      %1697 = vmatpush1.msra.mxu0 %v906
      %1698 = vmatprep.subr.mxu0 0.0
      %1699 = vmatpush2.msra.mxu0 0.0
      %1700 = vmatprep.subr.mxu0 0.0
      %1701 = vmatpush2.msra.mxu0 0.0
      %1702 = vmatprep.subr.mxu0 0.0
      %1703 = vmatpush2.msra.mxu0 0.0
      %1704 = vmatprep.subr.mxu0 0.0
      %1705 = vmatpush2.msra.mxu0 0.0
      %1706 = vmatprep.subr.mxu0 0.0
      %1707 = vmatpush2.msra.mxu0 0.0
      %1708 = vmatprep.subr.mxu0 0.0
      %1709 = vmatpush2.msra.mxu0 0.0
      %1710 = vmatprep.subr.mxu0 0.0
      %1711 = vmatpush2.msra.mxu0 0.0
      %1712 = vmatprep.subr.mxu0 0.0
      %1713 = vmatpush2.msra.mxu0 0.0
      %1714 = vmatprep.subr.mxu0 0.0
      %1715 = vmatpush2.msra.mxu0 0.0
      %1716 = vmatprep.subr.mxu0 0.0
      %1717 = vmatpush2.msra.mxu0 0.0
      %1718 = vmatprep.subr.mxu0 0.0
      %1719 = vmatpush2.msra.mxu0 0.0
      %1720 = vmatprep.subr.mxu0 0.0
      %1721 = vmatpush2.msra.mxu0 0.0
      %1722 = vmatprep.subr.mxu0 0.0
      %1723 = vmatpush2.msra.mxu0 0.0
      %1724 = vmatprep.subr.mxu0 0.0
      %1725 = vmatpush2.msra.mxu0 0.0
      %1726 = vmatprep.subr.mxu0 0.0
      %1727 = vmatpush2.msra.mxu0 0.0
      %1728 = vmatprep.subr.mxu0 0.0
      %1729 = vmatpush2.msra.mxu0 0.0
      %1730 = vmatprep.mubr.f32.mxu0 0.0
      %1731 = vmatmul.mubr.f32.gmra.mxu0 %v1661
      %v1732 = vpop.f32.mrf.mxu0
      %v1733 = vadd.f32 0.0, %v1732
      %v1734 = vpop.f32.mrf.mxu0
      %1735 = vmatprep.mubr.f32.mxu0 0.0
      %1736 = vmatmul.mubr.f32.gmra.mxu0 %v1664
      %v1737 = vpop.f32.mrf.mxu0
      %v1738 = vadd.f32 0.0, %v1737
      %v1739 = vpop.f32.mrf.mxu0
      %1740 = vdwg.mxu0
      %v1741 = vmul.f32 %v1650, %v1650
      %v1742 = vmul.f32 %v1655, %v1655
      %v1743 = vsub.f32 %v1733, %v1741
      %v1744 = vsub.f32 %v1738, %v1742
      %v1745 = vmax.f32 %v1743, 0.0
      %v1746 = vmax.f32 %v1744, 0.0
      %v1747 = vadd.f32 %v1745, 1e-06
      %v1748 = vadd.f32 %v1746, 1e-06
      %v1749 = vrsqrt.pop %v1747
      %v1750 = vrsqrt.pop %v1748
      %v1751 = vsub.f32 0.0, %v1650
      %v1752 = vsub.f32 0.0, %v1655
      %v1753 = vmul.f32 %v1751, %v1749
      %v1754 = vmul.f32 %v1752, %v1750
      %v1756 = vsel %vm990, %v1749, 0
      %v1759 = vsel %vm990, %v1750, 0
      %v1762 = vsel %vm990, %v1753, 0
      %v1765 = vsel %vm990, %v1754, 0
      %1767 = vmatprep.subr.mxu0 0.0
      %1768 = vmatpush1.msra.mxu0 0.0
      %1769 = vmatprep.subr.mxu0 0.0
      %1770 = vmatpush1.msra.mxu0 0.0
      %1771 = vmatprep.subr.mxu0 0.0
      %1772 = vmatpush1.msra.mxu0 0.0
      %1773 = vmatprep.subr.mxu0 0.0
      %1774 = vmatpush1.msra.mxu0 0.0
      %1775 = vmatprep.subr.mxu0 0.0
      %1776 = vmatpush1.msra.mxu0 0.0
      %1777 = vmatprep.subr.mxu0 0.0
      %1778 = vmatpush1.msra.mxu0 0.0
      %1779 = vmatprep.subr.mxu0 0.0
      %1780 = vmatpush1.msra.mxu0 0.0
      %1781 = vmatprep.subr.mxu0 0.0
      %1782 = vmatpush1.msra.mxu0 0.0
      %1783 = vmatprep.subr.mxu0 0.0
      %1784 = vmatpush1.msra.mxu0 0.0
      %1785 = vmatprep.subr.mxu0 0.0
      %1786 = vmatpush1.msra.mxu0 0.0
      %1787 = vmatprep.subr.mxu0 0.0
      %1788 = vmatpush1.msra.mxu0 0.0
      %1789 = vmatprep.subr.mxu0 0.0
      %1790 = vmatpush1.msra.mxu0 0.0
      %1791 = vmatprep.subr.mxu0 0.0
      %1792 = vmatpush1.msra.mxu0 0.0
      %1793 = vmatprep.subr.mxu0 0.0
      %1794 = vmatpush1.msra.mxu0 0.0
      %1795 = vmatprep.subr.mxu0 0.0
      %1796 = vmatpush1.msra.mxu0 0.0
      %1797 = vmatprep.subr.mxu0 0.0
      %1798 = vmatpush1.msra.mxu0 %v999
      %1799 = vmatprep.subr.mxu0 0.0
      %1800 = vmatpush2.msra.mxu0 0.0
      %1801 = vmatprep.subr.mxu0 0.0
      %1802 = vmatpush2.msra.mxu0 0.0
      %1803 = vmatprep.subr.mxu0 0.0
      %1804 = vmatpush2.msra.mxu0 0.0
      %1805 = vmatprep.subr.mxu0 0.0
      %1806 = vmatpush2.msra.mxu0 0.0
      %1807 = vmatprep.subr.mxu0 0.0
      %1808 = vmatpush2.msra.mxu0 0.0
      %1809 = vmatprep.subr.mxu0 0.0
      %1810 = vmatpush2.msra.mxu0 0.0
      %1811 = vmatprep.subr.mxu0 0.0
      %1812 = vmatpush2.msra.mxu0 0.0
      %1813 = vmatprep.subr.mxu0 0.0
      %1814 = vmatpush2.msra.mxu0 0.0
      %1815 = vmatprep.subr.mxu0 0.0
      %1816 = vmatpush2.msra.mxu0 0.0
      %1817 = vmatprep.subr.mxu0 0.0
      %1818 = vmatpush2.msra.mxu0 0.0
      %1819 = vmatprep.subr.mxu0 0.0
      %1820 = vmatpush2.msra.mxu0 0.0
      %1821 = vmatprep.subr.mxu0 0.0
      %1822 = vmatpush2.msra.mxu0 0.0
      %1823 = vmatprep.subr.mxu0 0.0
      %1824 = vmatpush2.msra.mxu0 0.0
      %1825 = vmatprep.subr.mxu0 0.0
      %1826 = vmatpush2.msra.mxu0 0.0
      %1827 = vmatprep.subr.mxu0 0.0
      %1828 = vmatpush2.msra.mxu0 0.0
      %1829 = vmatprep.subr.mxu0 0.0
      %1830 = vmatpush2.msra.mxu0 0.0
      %1831 = vmatprep.mubr.f32.mxu0 0.0
      %1832 = vmatmul.mubr.f32.gmra.mxu0 %v1756
      %v1833 = vpop.f32.mrf.mxu0
      %v1834 = vadd.f32 0.0, %v1833
      %v1835 = vpop.f32.mrf.mxu0
      %1836 = vmatprep.mubr.f32.mxu0 0.0
      %1837 = vmatmul.mubr.f32.gmra.mxu0 %v1759
      %v1838 = vpop.f32.mrf.mxu0
      %v1839 = vadd.f32 0.0, %v1838
      %v1840 = vpop.f32.mrf.mxu0
      %1841 = vmatprep.mubr.f32.mxu0 0.0
      %1842 = vmatmul.mubr.f32.gmra.mxu0 %v1762
      %v1843 = vpop.f32.mrf.mxu0
      %v1844 = vadd.f32 0.0, %v1843
      %v1845 = vpop.f32.mrf.mxu0
      %1846 = vmatprep.mubr.f32.mxu0 0.0
      %1847 = vmatmul.mubr.f32.gmra.mxu0 %v1765
      %v1848 = vpop.f32.mrf.mxu0
      %v1849 = vadd.f32 0.0, %v1848
      %v1850 = vpop.f32.mrf.mxu0
      %1851 = vdwg.mxu0
      %v1852 = vmul.f32 %v1571, %v1834
      %v1853 = vmul.f32 %v1574, %v1839
      %v1854 = vadd.f32 %v1852, %v1844
      %v1855 = vadd.f32 %v1853, %v1849
      %v1856 = vld [vmem:[%s12 + $0x2] sm:$0x1]
      %v1857 = vlaneseq
      %v1858 = vshrl.u32 %v1857, 7
      %v1859 = vsub.s32 0, %v1858
      %v1860 = vrot.slane %v1856, %v1859
      %v1861 = vmul.f32 %v1854, %v1860
      %v1862 = vmul.f32 %v1855, %v1860
      %v1863 = vld [vmem:[%s12 + $0x3] sm:$0x1]
      %v1864 = vlaneseq
      %v1865 = vshrl.u32 %v1864, 7
      %v1866 = vsub.s32 0, %v1865
      %v1867 = vrot.slane %v1863, %v1866
      %v1868 = vadd.f32 %v1861, %v1867
      %v1869 = vadd.f32 %v1862, %v1867
      %v1870 = vadd.f32 %v1868, %v1462
      %v1871 = vadd.f32 %v1869, %v1463
      %1872 = vst.msk [vmem:[%s440] sm:$0xff] %vm907, %v1870
      %1873 = vst.msk [vmem:[%s440 + $0x8] sm:$0xff] %vm907, %v1871
      %p1874 = scmp.lt.s32.totalorder %s24, 1
      %s1875 = scalar_select %p1874, %s24, 1
      %s1876 = smul.addr %s1875, 2
      %s1877 = smul.addr %s1876, 8
      %s1878 = scalar_lea.vmem %s13, %s1877
      // Predicated region
      $region73: #{tpu_custom_call.1} parent=71 // pred_check
        %p1879 = pneg %p320
      $region74: #{tpu_custom_call.1} parent=71 // pred_check_branch
        %1881 = sbr.rel (%p1879) target = $region76
      $region75: #{tpu_custom_call.1} parent=71 // pred_region
        _
      $region76: #{tpu_custom_call.1} parent=71 // pred_fallthru
        _
    $region72: #{tpu_custom_call.1} parent=5 // pred_fallthru
      _
    %p1882 = scmp.le.s32.totalorder 2, %s19
    // Predicated region
    $region77: #{tpu_custom_call.1} parent=5 // pred_check
      %p1883 = pneg %p1882
    $region78: #{tpu_custom_call.1} parent=5 // pred_check_branch
      %1885 = sbr.rel (%p1883) target = $region80
    $region79: #{tpu_custom_call.1} parent=5 // pred_region
      %s1886 = ssub.s32 %s19, 2
      // Predicated region
      $region81: #{tpu_custom_call.1} parent=79 // pred_check
        %p1887 = pneg %p326
      $region82: #{tpu_custom_call.1} parent=79 // pred_check_branch
        %1889 = sbr.rel (%p1887) target = $region84
      $region83: #{tpu_custom_call.1} parent=79 // pred_region
        %p1890 = scmp.lt.s32.totalorder %s25, 1
        %s1891 = scalar_select %p1890, %s25, 1
        %s1892 = smul.addr %s1891, 2
        %s1893 = smul.addr %s1892, 8
        %s1894 = scalar_lea.vmem %s13, %s1893
      $region84: #{tpu_custom_call.1} parent=79 // pred_fallthru
        _
    $region80: #{tpu_custom_call.1} parent=5 // pred_fallthru
      _
  $region6: #{tpu_custom_call.1} parent=0 // loop_footer
    %s23 = sadd.s32 1, %s19
  $region7: #{tpu_custom_call.1} parent=0 // loop_footer_branch
    %18 = sbr.rel target = $region3
  $region8: #{tpu_custom_call.1} parent=0 // loop_exit
    _

</llo_original>
